<compile_context>
chip_gen: v7x
topology: tpu7x:2x2x1
jax: 0.10.0
libtpu: 0.0.40
codegen_flags: <defaults>
</compile_context>

<pallas_src>
import functools

import jax
import jax.numpy as jnp
from jax.experimental import pallas as pl
from jax.experimental.pallas import tpu as pltpu

BN_EPS = 1e-5
LANE = 128          # hidden-feature padding multiple (lane width)


def _round_up(n, m):
    return ((n + m - 1) // m) * m


@functools.lru_cache(maxsize=None)
def _vmem_limit_bytes():
    """Generation-aware scoped-VMEM budget (leave headroom under physical)."""
    try:
        kind = jax.devices()[0].device_kind.lower()
    except Exception:
        kind = ""
    if "v7" in kind:                       # v7x: 64 MiB physical per core
        return 48 * 1024 * 1024
    return 96 * 1024 * 1024                # v5e / v6e: 128 MiB physical


def _plan_tiles(n_real):
    """Node padding + (TM, TK) tile sizes for the SpMM pass."""
    if n_real > 8192:
        align, tm, tk = 2048, 512, 2048
    elif n_real > 2048:
        align, tm, tk = 1024, 256, 1024
    elif n_real > 512:
        align, tm, tk = 512, 256, 512
    else:
        align, tm, tk = 128, 128, 128
    n_pad = _round_up(n_real, align)
    # Keep >= 2 node tiles so the "parallel" axis can feed both v7x TensorCores.
    while tm > 128 and n_pad // tm < 2:
        tm //= 2
    return n_pad, tm, tk


def _shrink_for_vmem(tm, tk, h_p, limit):
    """Halve tiles until the double-buffered working set fits the budget."""
    def footprint(tm_, tk_):
        io = (tm_ * tk_ * 2 + tk_ * h_p * 2 + h_p * h_p * 2 +
              tm_ * h_p * 2 + 2 * h_p * 4)
        return 2 * io + tm_ * h_p * 4      # double buffers + f32 accumulator
    while tk > 128 and footprint(tm, tk) > limit // 2:
        tk //= 2
    while tm > 128 and footprint(tm, tk) > limit // 2:
        tm //= 2
    return tm, tk


# ----------------------------- Pallas kernels ------------------------------

def _fc_stats_kernel(x_ref, w_ref, h_ref, hsum_ref, hsq_ref):
    # h = x @ W (bf16 operands, f32 MXU accumulation); BN partial sums are
    # taken from the f32 value, h is stored in bf16.
    h = jnp.dot(x_ref[...], w_ref[...], preferred_element_type=jnp.float32)
    h_ref[...] = h.astype(h_ref.dtype)
    hsum_ref[0] = jnp.sum(h, axis=0, keepdims=True)
    hsq_ref[0] = jnp.sum(h * h, axis=0, keepdims=True)


def _conv_stats_kernel(adj_ref, x_ref, w_ref, h_ref, hsum_ref, hsq_ref,
                       acc_ref):
    # acc += adj_blk @ x_blk over k;  at k==last: h = acc @ W, emit BN sums.
    k = pl.program_id(1)

    @pl.when(k == 0)
    def _init():
        acc_ref[...] = jnp.zeros_like(acc_ref)

    acc_ref[...] += jnp.dot(adj_ref[...], x_ref[...],
                            preferred_element_type=jnp.float32)

    @pl.when(k == pl.num_programs(1) - 1)
    def _finalize():
        h = jnp.dot(acc_ref[...].astype(jnp.bfloat16), w_ref[...],
                    preferred_element_type=jnp.float32)
        h_ref[...] = h.astype(h_ref.dtype)
        hsum_ref[0] = jnp.sum(h, axis=0, keepdims=True)
        hsq_ref[0] = jnp.sum(h * h, axis=0, keepdims=True)


def _affine_relu_kernel(h_ref, scale_ref, shift_ref, o_ref):
    # out = relu(scale * h + shift)   (scale/shift precomputed in JAX)
    hn = h_ref[...].astype(jnp.float32) * scale_ref[...] + shift_ref[...]
    o_ref[...] = jnp.maximum(hn, 0.0).astype(o_ref.dtype)


def _affine_relu_res_kernel(h_ref, scale_ref, shift_ref, res_ref, o_ref):
    # out = relu(scale * h + shift) + residual
    hn = h_ref[...].astype(jnp.float32) * scale_ref[...] + shift_ref[...]
    out = jnp.maximum(hn, 0.0) + res_ref[...].astype(jnp.float32)
    o_ref[...] = out.astype(o_ref.dtype)


# ------------------------------ call wrappers -------------------------------

def _fc_matmul(x_bf16, w_bf16, row_tile, vmem_limit):
    n_p, in_p = x_bf16.shape
    h_p = w_bf16.shape[1]
    num_i = n_p // row_tile
    return pl.pallas_call(
        _fc_stats_kernel,
        out_shape=(jax.ShapeDtypeStruct((n_p, h_p), jnp.bfloat16),
                   jax.ShapeDtypeStruct((num_i, 1, h_p), jnp.float32),
                   jax.ShapeDtypeStruct((num_i, 1, h_p), jnp.float32)),
        grid=(num_i,),
        in_specs=[pl.BlockSpec((row_tile, in_p), lambda i: (i, 0)),
                  pl.BlockSpec((in_p, h_p), lambda i: (0, 0))],
        out_specs=(pl.BlockSpec((row_tile, h_p), lambda i: (i, 0)),
                   pl.BlockSpec((1, 1, h_p), lambda i: (i, 0, 0)),
                   pl.BlockSpec((1, 1, h_p), lambda i: (i, 0, 0))),
        compiler_params=pltpu.CompilerParams(
            dimension_semantics=("parallel",),
            vmem_limit_bytes=vmem_limit),
    )(x_bf16, w_bf16)


def _conv_matmul(adj_bf16, x_bf16, w_bf16, tm, tk, vmem_limit):
    n_p = adj_bf16.shape[0]
    h_p = w_bf16.shape[1]
    num_i = n_p // tm
    num_k = n_p // tk
    return pl.pallas_call(
        _conv_stats_kernel,
        out_shape=(jax.ShapeDtypeStruct((n_p, h_p), jnp.bfloat16),
                   jax.ShapeDtypeStruct((num_i, 1, h_p), jnp.float32),
                   jax.ShapeDtypeStruct((num_i, 1, h_p), jnp.float32)),
        grid=(num_i, num_k),
        in_specs=[pl.BlockSpec((tm, tk), lambda i, k: (i, k)),
                  pl.BlockSpec((tk, h_p), lambda i, k: (k, 0)),
                  pl.BlockSpec((h_p, h_p), lambda i, k: (0, 0))],
        out_specs=(pl.BlockSpec((tm, h_p), lambda i, k: (i, 0)),
                   pl.BlockSpec((1, 1, h_p), lambda i, k: (i, 0, 0)),
                   pl.BlockSpec((1, 1, h_p), lambda i, k: (i, 0, 0))),
        scratch_shapes=[pltpu.VMEM((tm, h_p), jnp.float32)],
        compiler_params=pltpu.CompilerParams(
            dimension_semantics=("parallel", "arbitrary"),
            vmem_limit_bytes=vmem_limit),
    )(adj_bf16, x_bf16, w_bf16)


def _bn_scale_shift(hsum, hsq, gamma, beta, n_real):
    """Hoisted BN statistics reduction (plain JAX, tiny): returns (1, h_p)
    scale/shift so the normalize kernel is a single FMA per element."""
    s = jnp.sum(hsum, axis=0)                       # (1, h_p)
    ss = jnp.sum(hsq, axis=0)                       # (1, h_p)
    inv_n = 1.0 / float(n_real)
    mean = s * inv_n
    var = jnp.maximum(ss * inv_n - mean * mean, 0.0)  # clamp E[x^2]-m^2 >= 0
    scale = gamma * jax.lax.rsqrt(var + BN_EPS)
    shift = beta - mean * scale
    return scale, shift


def _affine_relu(h, scale, shift, res, row_tile, vmem_limit):
    n_p, h_p = h.shape
    num_i = n_p // row_tile
    in_specs = [pl.BlockSpec((row_tile, h_p), lambda i: (i, 0)),
                pl.BlockSpec((1, h_p), lambda i: (0, 0)),
                pl.BlockSpec((1, h_p), lambda i: (0, 0))]
    if res is None:
        kernel = _affine_relu_kernel
        args = (h, scale, shift)
        aliases = {}
    else:
        kernel = _affine_relu_res_kernel
        in_specs = in_specs + [pl.BlockSpec((row_tile, h_p), lambda i: (i, 0))]
        args = (h, scale, shift, res)
        aliases = {3: 0}    # residual buffer aliases the output (P8)
    return pl.pallas_call(
        kernel,
        out_shape=jax.ShapeDtypeStruct((n_p, h_p), jnp.bfloat16),
        grid=(num_i,),
        in_specs=in_specs,
        out_specs=pl.BlockSpec((row_tile, h_p), lambda i: (i, 0)),
        input_output_aliases=aliases,
        compiler_params=pltpu.CompilerParams(
            dimension_semantics=("parallel",),
            vmem_limit_bytes=vmem_limit),
    )(*args)


# -------------------------------- glue (JAX) --------------------------------

def build_norm_adj(edge_index, edge_weight, n_real, n_pad):
    """Dense degree-normalized adjacency A[col[e], row[e]] += w_e*d_in*d_out,
    matching the PyTorch reference (degree over edge_index[1]; SparseTensor
    built with row=col, col=row).  Padded rows/cols stay exactly zero."""
    row, col = edge_index[0], edge_index[1]
    deg = jnp.zeros((n_real,), jnp.float32).at[col].add(1.0)
    d_norm_in = jnp.sqrt(1.0 / deg[col])
    d_norm_out = jnp.sqrt(1.0 / deg[row])
    value = edge_weight * d_norm_in * d_norm_out
    value = jnp.nan_to_num(value, nan=0.0, posinf=0.0, neginf=0.0)
    adj = jnp.zeros((n_pad, n_pad), jnp.float32).at[col, row].add(value)
    return adj


def init_params(key, in_channels, hidden_channels, num_layers):
    """PyTorch-default Linear init U(-1/sqrt(fan_in), +).  Hidden features are
    padded to 128 lanes (lane-dense stores); input features only to a bf16
    sublane multiple.  Linear biases are omitted: batch-statistics BN cancels
    them exactly."""
    in_p = _round_up(in_channels, 16)          # sublane pack only, not 128
    h_p = _round_up(hidden_channels, LANE)
    keys = jax.random.split(key, 1 + num_layers)
    params = {}

    bound0 = 1.0 / (in_channels ** 0.5)
    w0 = jax.random.uniform(keys[0], (in_channels, hidden_channels),
                            jnp.float32, -bound0, bound0)
    params["fc_w"] = (jnp.zeros((in_p, h_p), jnp.float32)
                      .at[:in_channels, :hidden_channels].set(w0)
                      .astype(jnp.bfloat16))

    # BatchNorm1d defaults: weight=1, bias=0 (padded lanes: gamma=1, beta=0).
    params["bn_g"] = [jnp.ones((1, h_p), jnp.float32)
                      for _ in range(num_layers + 1)]
    params["bn_b"] = [jnp.zeros((1, h_p), jnp.float32)
                      for _ in range(num_layers + 1)]

    bound = 1.0 / (hidden_channels ** 0.5)
    params["conv_w"] = []
    for i in range(num_layers):
        w = jax.random.uniform(keys[1 + i], (hidden_channels, hidden_channels),
                               jnp.float32, -bound, bound)
        params["conv_w"].append(
            jnp.zeros((h_p, h_p), jnp.float32)
            .at[:hidden_channels, :hidden_channels].set(w)
            .astype(jnp.bfloat16))
    return params


@jax.jit
def graph_conv_forward(params, x, edge_index, edge_weight):
    n_real, in_c = x.shape
    in_p, h_p = params["fc_w"].shape
    n_pad, tm, tk = _plan_tiles(n_real)
    vmem_limit = _vmem_limit_bytes()
    tm, tk = _shrink_for_vmem(tm, tk, h_p, vmem_limit)

    x_pad = (jnp.zeros((n_pad, in_p), jnp.float32)
             .at[:n_real, :in_c].set(x)
             .astype(jnp.bfloat16))
    adj = build_norm_adj(edge_index, edge_weight, n_real,
                         n_pad).astype(jnp.bfloat16)

    # fcs[0] -> BN -> ReLU   (dropout: identity, see TODO)
    h, hsum, hsq = _fc_matmul(x_pad, params["fc_w"], tk, vmem_limit)
    scale, shift = _bn_scale_shift(hsum, hsq, params["bn_g"][0],
                                   params["bn_b"][0], n_real)
    act = _affine_relu(h, scale, shift, None, tk, vmem_limit)

    # conv layers: act = relu(BN((adj @ act) @ W)) + act_prev
    for w, g, b in zip(params["conv_w"], params["bn_g"][1:],
                       params["bn_b"][1:]):
        h, hsum, hsq = _conv_matmul(adj, act, w, tm, tk, vmem_limit)
        scale, shift = _bn_scale_shift(hsum, hsq, g, b, n_real)
        act = _affine_relu(h, scale, shift, act, tk, vmem_limit)
    return act  # padded (n_pad, h_p) bf16; caller slices to (N, hidden)


# --------------------------- pure-JAX reference ------------------------------

def reference_forward(params, x, edge_index, edge_weight, in_channels, hidden):
    """Plain-JAX reference mirroring the kernel's bf16 rounding points."""
    f32 = jnp.float32
    n = x.shape[0]
    adj = build_norm_adj(edge_index, edge_weight, n, n) \
        .astype(jnp.bfloat16).astype(f32)
    xb = x.astype(jnp.bfloat16).astype(f32)
    w0 = params["fc_w"][:in_channels, :hidden].astype(f32)

    def bn_relu(h, g, b):
        # stats from f32 h; normalization applied to the bf16-stored h,
        # exactly as the kernels do.
        mean = jnp.mean(h, axis=0, keepdims=True)
        var = jnp.maximum(jnp.mean(h * h, axis=0, keepdims=True)
                          - mean * mean, 0.0)
        scale = g * jax.lax.rsqrt(var + BN_EPS)
        shift = b - mean * scale
        hq = h.astype(jnp.bfloat16).astype(f32)
        return jnp.maximum(hq * scale + shift, 0.0)

    h = xb @ w0
    h = bn_relu(h, params["bn_g"][0][:, :hidden], params["bn_b"][0][:, :hidden])
    h = h.astype(jnp.bfloat16).astype(f32)
    for i, w in enumerate(params["conv_w"]):
        wf = w[:hidden, :hidden].astype(f32)
        agg = adj @ h
        hh = agg.astype(jnp.bfloat16).astype(f32) @ wf
        hh = bn_relu(hh, params["bn_g"][i + 1][:, :hidden],
                     params["bn_b"][i + 1][:, :hidden])
        h = (hh + h).astype(jnp.bfloat16).astype(f32)
    return h


# ---------------------------------- main -------------------------------------

if __name__ == "__main__":
    N_NODES = 200
    IN_CHANNELS = 16
    HIDDEN = 32
    NUM_LAYERS = 2
    N_EDGES = 800

    root = jax.random.PRNGKey(0)
    k_x, k_ei, k_ew, k_p = jax.random.split(root, 4)

    x = jax.random.normal(k_x, (N_NODES, IN_CHANNELS), jnp.float32)
    edge_index = jax.random.randint(k_ei, (2, N_EDGES), 0, N_NODES, jnp.int32)
    edge_weight = jax.random.uniform(k_ew, (N_EDGES,), jnp.float32)

    params = init_params(k_p, IN_CHANNELS, HIDDEN, NUM_LAYERS)

    out_pad = graph_conv_forward(params, x, edge_index, edge_weight)
    out_pad = jax.block_until_ready(out_pad)
    out = out_pad[:N_NODES, :HIDDEN].astype(jnp.float32)

    assert out.shape == (N_NODES, HIDDEN), out.shape
    assert bool(jnp.all(jnp.isfinite(out)))

    ref = reference_forward(params, x, edge_index, edge_weight,
                            IN_CHANNELS, HIDDEN)
    max_err = float(jnp.max(jnp.abs(out - ref)))
    assert max_err < 5e-2, f"max |pallas - reference| = {max_err}"

    print("KERNEL_OK")
</pallas_src>

<mosaic_0001>
module attributes {stable_mosaic.version = 11 : i64} {
  func.func private @main(%arg0: i32) attributes {dimension_semantics = [#tpu.dimension_semantics<core_parallel>], iteration_bounds = array<i64: 2>, tpu.core_type = #tpu.core_type<sc_scalar_subcore>, window_params = []} {
    return
  }
}

module attributes {stable_mosaic.version = 11 : i64} {
  func.func private @main(%arg0: i32) attributes {dimension_semantics = [#tpu.dimension_semantics<core_parallel>], iteration_bounds = array<i64: 2>, tpu.core_type = #tpu.core_type<sc_scalar_subcore>, window_params = []} {
    return
  }
}

module attributes {stable_mosaic.version = 11 : i64} {
  func.func @_fc_stats_kernel(%arg0: i32, %arg1: memref<128x16xbf16, #tpu.memory_space<vmem>>, %arg2: memref<16x128xbf16, #tpu.memory_space<vmem>>, %arg3: memref<128x128xbf16, #tpu.memory_space<vmem>>, %arg4: memref<1x1x128xf32, #tpu.memory_space<vmem>>, %arg5: memref<1x1x128xf32, #tpu.memory_space<vmem>>) attributes {dimension_semantics = [#tpu.dimension_semantics<parallel>], iteration_bounds = array<i64: 2>, scalar_prefetch = 0 : i64, scratch_operands = 0 : i64, tpu.core_type = #tpu.core_type<tc>, window_params = [{transform_indices = @transform_0, window_bounds = array<i64: 128, 16>}, {pipeline_mode = #tpu.pipeline_mode<synchronous>, transform_indices = @transform_1, window_bounds = array<i64: 16, 128>}, {transform_indices = @transform_2, window_bounds = array<i64: 128, 128>}, {transform_indices = @transform_3, window_bounds = array<i64: 1, 1, 128>}, {transform_indices = @transform_4, window_bounds = array<i64: 1, 1, 128>}]} {
    %c0 = arith.constant 0 : index
    %c0_0 = arith.constant 0 : index
    %0 = vector.load %arg1[%c0, %c0_0] : memref<128x16xbf16, #tpu.memory_space<vmem>>, vector<128x16xbf16>
    %c0_1 = arith.constant 0 : index
    %c0_2 = arith.constant 0 : index
    %1 = vector.load %arg2[%c0_1, %c0_2] : memref<16x128xbf16, #tpu.memory_space<vmem>>, vector<16x128xbf16>
    %cst = arith.constant dense<0.000000e+00> : vector<128x128xf32>
    %2 = tpu.matmul %0, %1, %cst {dimension_numbers = #tpu.dot_dimension_numbers<[1], [0], [0], [1], [0, 0, 1, 1], [], []>} : vector<128x16xbf16>, vector<16x128xbf16>, vector<128x128xf32> -> vector<128x128xf32>
    %3 = arith.truncf %2 : vector<128x128xf32> to vector<128x128xbf16>
    %c0_3 = arith.constant 0 : index
    %c0_4 = arith.constant 0 : index
    %4 = vector.load %arg3[%c0_3, %c0_4] : memref<128x128xbf16, #tpu.memory_space<vmem>>, vector<128x128xbf16>
    tpu.vector_store %arg3[%c0_3, %c0_4], %3 {strides = array<i32>} : memref<128x128xbf16, #tpu.memory_space<vmem>>, vector<128x128xbf16>,
    %cst_5 = arith.constant dense<0.000000e+00> : vector<128xf32>
    %5 = vector.multi_reduction <add>, %2, %cst_5 [0] : vector<128x128xf32> to vector<128xf32>
    %6 = vector.shape_cast %5 : vector<128xf32> to vector<1x128xf32>
    %c0_6 = arith.constant 0 : index
    %c0_7 = arith.constant 0 : index
    %c0_8 = arith.constant 0 : index
    %7 = vector.load %arg4[%c0_6, %c0_7, %c0_8] : memref<1x1x128xf32, #tpu.memory_space<vmem>>, vector<1x1x128xf32>
    %8 = vector.shape_cast %7 : vector<1x1x128xf32> to vector<1x128xf32>
    %9 = vector.shape_cast %6 : vector<1x128xf32> to vector<1x1x128xf32>
    tpu.vector_store %arg4[%c0_6, %c0_7, %c0_8], %9 {strides = array<i32>} : memref<1x1x128xf32, #tpu.memory_space<vmem>>, vector<1x1x128xf32>,
    %10 = arith.mulf %2, %2 : vector<128x128xf32>
    %cst_9 = arith.constant dense<0.000000e+00> : vector<128xf32>
    %11 = vector.multi_reduction <add>, %10, %cst_9 [0] : vector<128x128xf32> to vector<128xf32>
    %12 = vector.shape_cast %11 : vector<128xf32> to vector<1x128xf32>
    %c0_10 = arith.constant 0 : index
    %c0_11 = arith.constant 0 : index
    %c0_12 = arith.constant 0 : index
    %13 = vector.load %arg5[%c0_10, %c0_11, %c0_12] : memref<1x1x128xf32, #tpu.memory_space<vmem>>, vector<1x1x128xf32>
    %14 = vector.shape_cast %13 : vector<1x1x128xf32> to vector<1x128xf32>
    %15 = vector.shape_cast %12 : vector<1x128xf32> to vector<1x1x128xf32>
    tpu.vector_store %arg5[%c0_10, %c0_11, %c0_12], %15 {strides = array<i32>} : memref<1x1x128xf32, #tpu.memory_space<vmem>>, vector<1x1x128xf32>,
    return
  }
  func.func @transform_0(%arg0: i32) -> (i32, i32) {
    %c0_i32 = arith.constant 0 : i32
    %c0_i32_0 = arith.constant 0 : i32
    return %arg0, %c0_i32 : i32, i32
  }
  func.func @transform_1(%arg0: i32) -> (i32, i32) {
    %c0_i32 = arith.constant 0 : i32
    %c0_i32_0 = arith.constant 0 : i32
    %c0_i32_1 = arith.constant 0 : i32
    return %c0_i32, %c0_i32_0 : i32, i32
  }
  func.func @transform_2(%arg0: i32) -> (i32, i32) {
    %c0_i32 = arith.constant 0 : i32
    %c0_i32_0 = arith.constant 0 : i32
    return %arg0, %c0_i32 : i32, i32
  }
  func.func @transform_3(%arg0: i32) -> (i32, i32, i32) {
    %c0_i32 = arith.constant 0 : i32
    %c0_i32_0 = arith.constant 0 : i32
    %c0_i32_1 = arith.constant 0 : i32
    return %arg0, %c0_i32, %c0_i32_0 : i32, i32, i32
  }
  func.func @transform_4(%arg0: i32) -> (i32, i32, i32) {
    %c0_i32 = arith.constant 0 : i32
    %c0_i32_0 = arith.constant 0 : i32
    %c0_i32_1 = arith.constant 0 : i32
    return %arg0, %c0_i32, %c0_i32_0 : i32, i32, i32
  }
}

module attributes {stable_mosaic.version = 11 : i64} {
  func.func @_affine_relu_kernel(%arg0: i32, %arg1: memref<128x128xbf16, #tpu.memory_space<vmem>>, %arg2: memref<1x128xf32, #tpu.memory_space<vmem>>, %arg3: memref<1x128xf32, #tpu.memory_space<vmem>>, %arg4: memref<128x128xbf16, #tpu.memory_space<vmem>>) attributes {dimension_semantics = [#tpu.dimension_semantics<parallel>], iteration_bounds = array<i64: 2>, scalar_prefetch = 0 : i64, scratch_operands = 0 : i64, tpu.core_type = #tpu.core_type<tc>, window_params = [{transform_indices = @transform_0, window_bounds = array<i64: 128, 128>}, {pipeline_mode = #tpu.pipeline_mode<synchronous>, transform_indices = @transform_1, window_bounds = array<i64: 1, 128>}, {pipeline_mode = #tpu.pipeline_mode<synchronous>, transform_indices = @transform_2, window_bounds = array<i64: 1, 128>}, {transform_indices = @transform_3, window_bounds = array<i64: 128, 128>}]} {
    %c0 = arith.constant 0 : index
    %c0_0 = arith.constant 0 : index
    %0 = vector.load %arg1[%c0, %c0_0] : memref<128x128xbf16, #tpu.memory_space<vmem>>, vector<128x128xbf16>
    %1 = arith.extf %0 : vector<128x128xbf16> to vector<128x128xf32>
    %c0_1 = arith.constant 0 : index
    %c0_2 = arith.constant 0 : index
    %2 = vector.load %arg2[%c0_1, %c0_2] : memref<1x128xf32, #tpu.memory_space<vmem>>, vector<1x128xf32>
    %3 = vector.broadcast %2 : vector<1x128xf32> to vector<128x128xf32>
    %4 = arith.mulf %1, %3 : vector<128x128xf32>
    %c0_3 = arith.constant 0 : index
    %c0_4 = arith.constant 0 : index
    %5 = vector.load %arg3[%c0_3, %c0_4] : memref<1x128xf32, #tpu.memory_space<vmem>>, vector<1x128xf32>
    %6 = vector.broadcast %5 : vector<1x128xf32> to vector<128x128xf32>
    %7 = arith.addf %4, %6 : vector<128x128xf32>
    %cst = arith.constant 0.000000e+00 : f32
    %8 = vector.broadcast %cst : f32 to vector<128x128xf32>
    %9 = arith.maximumf %7, %8 : vector<128x128xf32>
    %10 = arith.truncf %9 : vector<128x128xf32> to vector<128x128xbf16>
    %c0_5 = arith.constant 0 : index
    %c0_6 = arith.constant 0 : index
    %11 = vector.load %arg4[%c0_5, %c0_6] : memref<128x128xbf16, #tpu.memory_space<vmem>>, vector<128x128xbf16>
    tpu.vector_store %arg4[%c0_5, %c0_6], %10 {strides = array<i32>} : memref<128x128xbf16, #tpu.memory_space<vmem>>, vector<128x128xbf16>,
    return
  }
  func.func @transform_0(%arg0: i32) -> (i32, i32) {
    %c0_i32 = arith.constant 0 : i32
    %c0_i32_0 = arith.constant 0 : i32
    return %arg0, %c0_i32 : i32, i32
  }
  func.func @transform_1(%arg0: i32) -> (i32, i32) {
    %c0_i32 = arith.constant 0 : i32
    %c0_i32_0 = arith.constant 0 : i32
    %c0_i32_1 = arith.constant 0 : i32
    return %c0_i32, %c0_i32_0 : i32, i32
  }
  func.func @transform_2(%arg0: i32) -> (i32, i32) {
    %c0_i32 = arith.constant 0 : i32
    %c0_i32_0 = arith.constant 0 : i32
    %c0_i32_1 = arith.constant 0 : i32
    return %c0_i32, %c0_i32_0 : i32, i32
  }
  func.func @transform_3(%arg0: i32) -> (i32, i32) {
    %c0_i32 = arith.constant 0 : i32
    %c0_i32_0 = arith.constant 0 : i32
    return %arg0, %c0_i32 : i32, i32
  }
}

module attributes {stable_mosaic.version = 11 : i64} {
  func.func @_affine_relu_res_kernel(%arg0: i32, %arg1: memref<128x128xbf16, #tpu.memory_space<vmem>>, %arg2: memref<1x128xf32, #tpu.memory_space<vmem>>, %arg3: memref<1x128xf32, #tpu.memory_space<vmem>>, %arg4: memref<128x128xbf16, #tpu.memory_space<vmem>>, %arg5: memref<128x128xbf16, #tpu.memory_space<vmem>>) attributes {dimension_semantics = [#tpu.dimension_semantics<parallel>], iteration_bounds = array<i64: 2>, scalar_prefetch = 0 : i64, scratch_operands = 0 : i64, tpu.core_type = #tpu.core_type<tc>, window_params = [{transform_indices = @transform_0, window_bounds = array<i64: 128, 128>}, {pipeline_mode = #tpu.pipeline_mode<synchronous>, transform_indices = @transform_1, window_bounds = array<i64: 1, 128>}, {pipeline_mode = #tpu.pipeline_mode<synchronous>, transform_indices = @transform_2, window_bounds = array<i64: 1, 128>}, {transform_indices = @transform_3, window_bounds = array<i64: 128, 128>}, {transform_indices = @transform_4, window_bounds = array<i64: 128, 128>}]} {
    %c0 = arith.constant 0 : index
    %c0_0 = arith.constant 0 : index
    %0 = vector.load %arg1[%c0, %c0_0] : memref<128x128xbf16, #tpu.memory_space<vmem>>, vector<128x128xbf16>
    %1 = arith.extf %0 : vector<128x128xbf16> to vector<128x128xf32>
    %c0_1 = arith.constant 0 : index
    %c0_2 = arith.constant 0 : index
    %2 = vector.load %arg2[%c0_1, %c0_2] : memref<1x128xf32, #tpu.memory_space<vmem>>, vector<1x128xf32>
    %3 = vector.broadcast %2 : vector<1x128xf32> to vector<128x128xf32>
    %4 = arith.mulf %1, %3 : vector<128x128xf32>
    %c0_3 = arith.constant 0 : index
    %c0_4 = arith.constant 0 : index
    %5 = vector.load %arg3[%c0_3, %c0_4] : memref<1x128xf32, #tpu.memory_space<vmem>>, vector<1x128xf32>
    %6 = vector.broadcast %5 : vector<1x128xf32> to vector<128x128xf32>
    %7 = arith.addf %4, %6 : vector<128x128xf32>
    %cst = arith.constant 0.000000e+00 : f32
    %8 = vector.broadcast %cst : f32 to vector<128x128xf32>
    %9 = arith.maximumf %7, %8 : vector<128x128xf32>
    %c0_5 = arith.constant 0 : index
    %c0_6 = arith.constant 0 : index
    %10 = vector.load %arg4[%c0_5, %c0_6] : memref<128x128xbf16, #tpu.memory_space<vmem>>, vector<128x128xbf16>
    %11 = arith.extf %10 : vector<128x128xbf16> to vector<128x128xf32>
    %12 = arith.addf %9, %11 : vector<128x128xf32>
    %13 = arith.truncf %12 : vector<128x128xf32> to vector<128x128xbf16>
    %c0_7 = arith.constant 0 : index
    %c0_8 = arith.constant 0 : index
    %14 = vector.load %arg5[%c0_7, %c0_8] : memref<128x128xbf16, #tpu.memory_space<vmem>>, vector<128x128xbf16>
    tpu.vector_store %arg5[%c0_7, %c0_8], %13 {strides = array<i32>} : memref<128x128xbf16, #tpu.memory_space<vmem>>, vector<128x128xbf16>,
    return
  }
  func.func @transform_0(%arg0: i32) -> (i32, i32) {
    %c0_i32 = arith.constant 0 : i32
    %c0_i32_0 = arith.constant 0 : i32
    return %arg0, %c0_i32 : i32, i32
  }
  func.func @transform_1(%arg0: i32) -> (i32, i32) {
    %c0_i32 = arith.constant 0 : i32
    %c0_i32_0 = arith.constant 0 : i32
    %c0_i32_1 = arith.constant 0 : i32
    return %c0_i32, %c0_i32_0 : i32, i32
  }
  func.func @transform_2(%arg0: i32) -> (i32, i32) {
    %c0_i32 = arith.constant 0 : i32
    %c0_i32_0 = arith.constant 0 : i32
    %c0_i32_1 = arith.constant 0 : i32
    return %c0_i32, %c0_i32_0 : i32, i32
  }
  func.func @transform_3(%arg0: i32) -> (i32, i32) {
    %c0_i32 = arith.constant 0 : i32
    %c0_i32_0 = arith.constant 0 : i32
    return %arg0, %c0_i32 : i32, i32
  }
  func.func @transform_4(%arg0: i32) -> (i32, i32) {
    %c0_i32 = arith.constant 0 : i32
    %c0_i32_0 = arith.constant 0 : i32
    return %arg0, %c0_i32 : i32, i32
  }
}

module attributes {stable_mosaic.version = 11 : i64} {
  func.func @_conv_stats_kernel(%arg0: i32, %arg1: i32, %arg2: memref<128x128xbf16, #tpu.memory_space<vmem>>, %arg3: memref<128x128xbf16, #tpu.memory_space<vmem>>, %arg4: memref<128x128xbf16, #tpu.memory_space<vmem>>, %arg5: memref<128x128xbf16, #tpu.memory_space<vmem>>, %arg6: memref<1x1x128xf32, #tpu.memory_space<vmem>>, %arg7: memref<1x1x128xf32, #tpu.memory_space<vmem>>, %arg8: memref<128x128xf32, #tpu.memory_space<vmem>>) attributes {dimension_semantics = [#tpu.dimension_semantics<parallel>, #tpu.dimension_semantics<arbitrary>], iteration_bounds = array<i64: 2, 2>, scalar_prefetch = 0 : i64, scratch_operands = 1 : i64, tpu.core_type = #tpu.core_type<tc>, window_params = [{transform_indices = @transform_0, window_bounds = array<i64: 128, 128>}, {transform_indices = @transform_1, window_bounds = array<i64: 128, 128>}, {pipeline_mode = #tpu.pipeline_mode<synchronous>, transform_indices = @transform_2, window_bounds = array<i64: 128, 128>}, {transform_indices = @transform_3, window_bounds = array<i64: 128, 128>}, {transform_indices = @transform_4, window_bounds = array<i64: 1, 1, 128>}, {transform_indices = @transform_5, window_bounds = array<i64: 1, 1, 128>}]} {
    %c0_i32 = arith.constant 0 : i32
    %0 = arith.cmpi eq, %arg1, %c0_i32 : i32
    %1 = arith.extui %0 : i1 to i32
    %c0_i32_0 = arith.constant 0 : i32
    %2 = arith.cmpi ne, %1, %c0_i32_0 : i32
    scf.if %2 {
      %cst_9 = arith.constant 0.000000e+00 : f32
      %12 = vector.broadcast %cst_9 : f32 to vector<128x128xf32>
      %c0_10 = arith.constant 0 : index
      %c0_11 = arith.constant 0 : index
      %13 = vector.load %arg8[%c0_10, %c0_11] : memref<128x128xf32, #tpu.memory_space<vmem>>, vector<128x128xf32>
      tpu.vector_store %arg8[%c0_10, %c0_11], %12 {strides = array<i32>} : memref<128x128xf32, #tpu.memory_space<vmem>>, vector<128x128xf32>,
    } else {
    }
    %c0 = arith.constant 0 : index
    %c0_1 = arith.constant 0 : index
    %3 = vector.load %arg8[%c0, %c0_1] : memref<128x128xf32, #tpu.memory_space<vmem>>, vector<128x128xf32>
    %c0_2 = arith.constant 0 : index
    %c0_3 = arith.constant 0 : index
    %4 = vector.load %arg2[%c0_2, %c0_3] : memref<128x128xbf16, #tpu.memory_space<vmem>>, vector<128x128xbf16>
    %c0_4 = arith.constant 0 : index
    %c0_5 = arith.constant 0 : index
    %5 = vector.load %arg3[%c0_4, %c0_5] : memref<128x128xbf16, #tpu.memory_space<vmem>>, vector<128x128xbf16>
    %cst = arith.constant dense<0.000000e+00> : vector<128x128xf32>
    %6 = tpu.matmul %4, %5, %cst {dimension_numbers = #tpu.dot_dimension_numbers<[1], [0], [0], [1], [0, 0, 1, 1], [], []>} : vector<128x128xbf16>, vector<128x128xbf16>, vector<128x128xf32> -> vector<128x128xf32>
    %7 = arith.addf %3, %6 : vector<128x128xf32>
    %c0_6 = arith.constant 0 : index
    %c0_7 = arith.constant 0 : index
    %8 = vector.load %arg8[%c0_6, %c0_7] : memref<128x128xf32, #tpu.memory_space<vmem>>, vector<128x128xf32>
    tpu.vector_store %arg8[%c0_6, %c0_7], %7 {strides = array<i32>} : memref<128x128xf32, #tpu.memory_space<vmem>>, vector<128x128xf32>,
    %c1_i32 = arith.constant 1 : i32
    %9 = arith.cmpi eq, %arg1, %c1_i32 : i32
    %10 = arith.extui %9 : i1 to i32
    %c0_i32_8 = arith.constant 0 : i32
    %11 = arith.cmpi ne, %10, %c0_i32_8 : i32
    scf.if %11 {
      %c0_9 = arith.constant 0 : index
      %c0_10 = arith.constant 0 : index
      %12 = vector.load %arg8[%c0_9, %c0_10] : memref<128x128xf32, #tpu.memory_space<vmem>>, vector<128x128xf32>
      %13 = arith.truncf %12 : vector<128x128xf32> to vector<128x128xbf16>
      %c0_11 = arith.constant 0 : index
      %c0_12 = arith.constant 0 : index
      %14 = vector.load %arg4[%c0_11, %c0_12] : memref<128x128xbf16, #tpu.memory_space<vmem>>, vector<128x128xbf16>
      %cst_13 = arith.constant dense<0.000000e+00> : vector<128x128xf32>
      %15 = tpu.matmul %13, %14, %cst_13 {dimension_numbers = #tpu.dot_dimension_numbers<[1], [0], [0], [1], [0, 0, 1, 1], [], []>} : vector<128x128xbf16>, vector<128x128xbf16>, vector<128x128xf32> -> vector<128x128xf32>
      %16 = arith.truncf %15 : vector<128x128xf32> to vector<128x128xbf16>
      %c0_14 = arith.constant 0 : index
      %c0_15 = arith.constant 0 : index
      %17 = vector.load %arg5[%c0_14, %c0_15] : memref<128x128xbf16, #tpu.memory_space<vmem>>, vector<128x128xbf16>
      tpu.vector_store %arg5[%c0_14, %c0_15], %16 {strides = array<i32>} : memref<128x128xbf16, #tpu.memory_space<vmem>>, vector<128x128xbf16>,
      %cst_16 = arith.constant dense<0.000000e+00> : vector<128xf32>
      %18 = vector.multi_reduction <add>, %15, %cst_16 [0] : vector<128x128xf32> to vector<128xf32>
      %19 = vector.shape_cast %18 : vector<128xf32> to vector<1x128xf32>
      %c0_17 = arith.constant 0 : index
      %c0_18 = arith.constant 0 : index
      %c0_19 = arith.constant 0 : index
      %20 = vector.load %arg6[%c0_17, %c0_18, %c0_19] : memref<1x1x128xf32, #tpu.memory_space<vmem>>, vector<1x1x128xf32>
      %21 = vector.shape_cast %20 : vector<1x1x128xf32> to vector<1x128xf32>
      %22 = vector.shape_cast %19 : vector<1x128xf32> to vector<1x1x128xf32>
      tpu.vector_store %arg6[%c0_17, %c0_18, %c0_19], %22 {strides = array<i32>} : memref<1x1x128xf32, #tpu.memory_space<vmem>>, vector<1x1x128xf32>,
      %23 = arith.mulf %15, %15 : vector<128x128xf32>
      %cst_20 = arith.constant dense<0.000000e+00> : vector<128xf32>
      %24 = vector.multi_reduction <add>, %23, %cst_20 [0] : vector<128x128xf32> to vector<128xf32>
      %25 = vector.shape_cast %24 : vector<128xf32> to vector<1x128xf32>
      %c0_21 = arith.constant 0 : index
      %c0_22 = arith.constant 0 : index
      %c0_23 = arith.constant 0 : index
      %26 = vector.load %arg7[%c0_21, %c0_22, %c0_23] : memref<1x1x128xf32, #tpu.memory_space<vmem>>, vector<1x1x128xf32>
      %27 = vector.shape_cast %26 : vector<1x1x128xf32> to vector<1x128xf32>
      %28 = vector.shape_cast %25 : vector<1x128xf32> to vector<1x1x128xf32>
      tpu.vector_store %arg7[%c0_21, %c0_22, %c0_23], %28 {strides = array<i32>} : memref<1x1x128xf32, #tpu.memory_space<vmem>>, vector<1x1x128xf32>,
    } else {
    }
    return
  }
  func.func @transform_0(%arg0: i32, %arg1: i32) -> (i32, i32) {
    %c0_i32 = arith.constant 0 : i32
    return %arg0, %arg1 : i32, i32
  }
  func.func @transform_1(%arg0: i32, %arg1: i32) -> (i32, i32) {
    %c0_i32 = arith.constant 0 : i32
    %c0_i32_0 = arith.constant 0 : i32
    return %arg1, %c0_i32 : i32, i32
  }
  func.func @transform_2(%arg0: i32, %arg1: i32) -> (i32, i32) {
    %c0_i32 = arith.constant 0 : i32
    %c0_i32_0 = arith.constant 0 : i32
    %c0_i32_1 = arith.constant 0 : i32
    return %c0_i32, %c0_i32_0 : i32, i32
  }
  func.func @transform_3(%arg0: i32, %arg1: i32) -> (i32, i32) {
    %c0_i32 = arith.constant 0 : i32
    %c0_i32_0 = arith.constant 0 : i32
    return %arg0, %c0_i32 : i32, i32
  }
  func.func @transform_4(%arg0: i32, %arg1: i32) -> (i32, i32, i32) {
    %c0_i32 = arith.constant 0 : i32
    %c0_i32_0 = arith.constant 0 : i32
    %c0_i32_1 = arith.constant 0 : i32
    return %arg0, %c0_i32, %c0_i32_0 : i32, i32, i32
  }
  func.func @transform_5(%arg0: i32, %arg1: i32) -> (i32, i32, i32) {
    %c0_i32 = arith.constant 0 : i32
    %c0_i32_0 = arith.constant 0 : i32
    %c0_i32_1 = arith.constant 0 : i32
    return %arg0, %c0_i32, %c0_i32_0 : i32, i32, i32
  }
}

</mosaic_0001>

<llo_original>
// kernel: graph_conv_forward.6
$region0: #{graph_conv_forward.6}
  #allocation0 [shape = 'u32[]', space=smem, size = 0x4, offset = 0x4, fixed_abs, tag = 'smem constant byte address 0x4 - core index']
  #allocation1 [shape = 'u32[144,128]{1,0:T(1,128)}', space=vmem, size = 0x12000, scoped, tag = 'internal scratch']
  %s0 = inlined_call_operand.hbm [shape: bf16[256,16], index: 0, kind: input, shape index: {}]
  %s1 = inlined_call_operand.hbm [shape: bf16[16,128], index: 1, kind: input, shape index: {}]
  %s2 = inlined_call_operand.hbm [shape: bf16[256,128], index: 2, kind: output, shape index: {0}]
  %s3 = inlined_call_operand.hbm [shape: f32[2,1,128], index: 3, kind: output, shape index: {1}]
  %s4 = inlined_call_operand.hbm [shape: f32[2,1,128], index: 4, kind: output, shape index: {2}]
  %5 = xla_tuple %s2, %s3, %s4
  %s6 = sld [smem:[#allocation0]]
  $region65: #{graph_conv_forward.6} parent=0
    _
  %s8 = ssub.s32 1, %s6
  %s9 = scalar_select 0, %s8, %s6
  $region1: #{graph_conv_forward.6} parent=0
    #allocation2 [shape = 'u8[65536]{0}', space=vmem, size = 0x10000, scoped, tag = 'input window, operand 0']
    #allocation3 [shape = 's32[2]{0}', space=sflag, size = 0x8, scoped, tag = 'scoped memory for graph_conv_forward.6']
    #allocation4 [shape = 's32[2]{0}', space=sflag, size = 0x8, scoped, tag = 'scoped memory for graph_conv_forward.6']
    #allocation5 [shape = 'u8[4096]{0}', space=vmem, size = 0x1000, scoped, tag = 'input window, operand 1, single buffered']
    #allocation6 [shape = 's32[1]{0}', space=sflag, size = 0x4, scoped, tag = 'scoped memory for graph_conv_forward.6']
    #allocation7 [shape = 'u8[65536]{0}', space=vmem, size = 0x10000, scoped, tag = 'output window, operand 0']
    #allocation8 [shape = 'u8[1024]{0}', space=vmem, size = 0x400, scoped, tag = 'output window, operand 1']
    #allocation9 [shape = 's32[2]{0}', space=sflag, size = 0x8, scoped, tag = 'scoped memory for graph_conv_forward.6']
    #allocation10 [shape = 'u8[1024]{0}', space=vmem, size = 0x400, scoped, tag = 'output window, operand 2']
    %10 = vsyncpa [#allocation3], 0
    %s11 = scalar_lea.sflag [#allocation3], 1
    %12 = vsyncpa %s11, 0
    %13 = vsyncpa [#allocation6], 0
    %14 = vsyncpa [#allocation4], 0
    %s15 = scalar_lea.sflag [#allocation4], 1
    %16 = vsyncpa %s15, 0
    %17 = vsyncpa [#allocation9], 0
    %s18 = scalar_lea.sflag [#allocation9], 1
    %19 = vsyncpa %s18, 0
    loop: start=0, step=1, limit=4
    $region2: #{graph_conv_forward.6} parent=1 // loop_pre_header
      _
    $region3: #{graph_conv_forward.6} parent=1 // loop_header
      %s21 = sphi 0, %s25
      %p22 = scmp.ge.s32.totalorder %s21, 4
      %s31 = sphi 0, %s33
      %s34 = sphi 0, %s31
      %s35 = sphi 0, %s34
      %s51 = sphi 0, %s35
      %s55 = sphi 0, %s55
      %s57 = sphi 0, %s55
      %s58 = sphi 0, %s57
      %s72 = sphi 0, %s58
      %s78 = sphi 0, %s80
      %s81 = sphi 0, %s78
      %s82 = sphi 0, %s81
      %s98 = sphi 0, %s82
      %s104 = sphi 0, %s106
      %s107 = sphi 0, %s104
      %s108 = sphi 0, %s107
      %s124 = sphi 0, %s108
      %s130 = sphi 0, %s132
      %s133 = sphi 0, %s130
      %s134 = sphi 0, %s133
      %s150 = sphi 0, %s134
    $region4: #{graph_conv_forward.6} parent=1 // loop_header_branch
      %24 = sbr.rel (%p22) target = $region8
    $region5: #{graph_conv_forward.6} parent=1 // loop_body
      %s26 = ssub.s32 %s21, 1
      %s27 = ssub.s32 %s21, 2
      %s28 = sadd.s32 %s21, 1
      %s29 = ssub.s32 %s21, %s28
      %p30 = scmp.eq.s32.totalorder %s29, 0
      %s32 = sadd.s32 %s31, 1
      %s33 = scalar_select %p30, %s31, %s32
      %p36 = pneg %p30
      %p37 = scmp.eq.s32.totalorder %s21, 1
      %p38 = por %p36, %p37
      %p39 = scmp.ne.s32.totalorder %s31, %s34
      %p40 = scmp.eq.s32.totalorder %s21, 0
      %p41 = por %p39, %p40
      %p42 = scmp.ne.s32.totalorder %s31, %s34
      %p43 = scmp.eq.s32.totalorder %s26, 1
      %p44 = por %p42, %p43
      %p45 = scmp.ne.s32.totalorder %s34, %s35
      %p46 = scmp.eq.s32.totalorder %s26, 0
      %p47 = por %p45, %p46
      %p48 = scmp.ne.s32.totalorder %s34, %s35
      %p49 = scmp.eq.s32.totalorder %s27, 1
      %p50 = por %p48, %p49
      %p52 = scmp.ne.s32.totalorder %s35, %s51
      %p53 = scmp.eq.s32.totalorder %s27, 0
      %p54 = por %p52, %p53
      %s56 = sadd.s32 %s55, 1
      %p59 = scmp.eq.s32.totalorder %s21, 1
      %p60 = scmp.ne.s32.totalorder %s55, %s57
      %p61 = scmp.eq.s32.totalorder %s21, 0
      %p62 = por %p60, %p61
      %p63 = scmp.ne.s32.totalorder %s55, %s57
      %p64 = scmp.eq.s32.totalorder %s26, 1
      %p65 = por %p63, %p64
      %p66 = scmp.ne.s32.totalorder %s57, %s58
      %p67 = scmp.eq.s32.totalorder %s26, 0
      %p68 = por %p66, %p67
      %p69 = scmp.ne.s32.totalorder %s57, %s58
      %p70 = scmp.eq.s32.totalorder %s27, 1
      %p71 = por %p69, %p70
      %p73 = scmp.ne.s32.totalorder %s58, %s72
      %p74 = scmp.eq.s32.totalorder %s27, 0
      %p75 = por %p73, %p74
      %s76 = ssub.s32 %s21, %s28
      %p77 = scmp.eq.s32.totalorder %s76, 0
      %s79 = sadd.s32 %s78, 1
      %s80 = scalar_select %p77, %s78, %s79
      %p83 = pneg %p77
      %p84 = scmp.eq.s32.totalorder %s21, 1
      %p85 = por %p83, %p84
      %p86 = scmp.ne.s32.totalorder %s78, %s81
      %p87 = scmp.eq.s32.totalorder %s21, 0
      %p88 = por %p86, %p87
      %p89 = scmp.ne.s32.totalorder %s78, %s81
      %p90 = scmp.eq.s32.totalorder %s26, 1
      %p91 = por %p89, %p90
      %p92 = scmp.ne.s32.totalorder %s81, %s82
      %p93 = scmp.eq.s32.totalorder %s26, 0
      %p94 = por %p92, %p93
      %p95 = scmp.ne.s32.totalorder %s81, %s82
      %p96 = scmp.eq.s32.totalorder %s27, 1
      %p97 = por %p95, %p96
      %p99 = scmp.ne.s32.totalorder %s82, %s98
      %p100 = scmp.eq.s32.totalorder %s27, 0
      %p101 = por %p99, %p100
      %s102 = ssub.s32 %s21, %s28
      %p103 = scmp.eq.s32.totalorder %s102, 0
      %s105 = sadd.s32 %s104, 1
      %s106 = scalar_select %p103, %s104, %s105
      %p109 = pneg %p103
      %p110 = scmp.eq.s32.totalorder %s21, 1
      %p111 = por %p109, %p110
      %p112 = scmp.ne.s32.totalorder %s104, %s107
      %p113 = scmp.eq.s32.totalorder %s21, 0
      %p114 = por %p112, %p113
      %p115 = scmp.ne.s32.totalorder %s104, %s107
      %p116 = scmp.eq.s32.totalorder %s26, 1
      %p117 = por %p115, %p116
      %p118 = scmp.ne.s32.totalorder %s107, %s108
      %p119 = scmp.eq.s32.totalorder %s26, 0
      %p120 = por %p118, %p119
      %p121 = scmp.ne.s32.totalorder %s107, %s108
      %p122 = scmp.eq.s32.totalorder %s27, 1
      %p123 = por %p121, %p122
      %p125 = scmp.ne.s32.totalorder %s108, %s124
      %p126 = scmp.eq.s32.totalorder %s27, 0
      %p127 = por %p125, %p126
      %s128 = ssub.s32 %s21, %s28
      %p129 = scmp.eq.s32.totalorder %s128, 0
      %s131 = sadd.s32 %s130, 1
      %s132 = scalar_select %p129, %s130, %s131
      %p135 = pneg %p129
      %p136 = scmp.eq.s32.totalorder %s21, 1
      %p137 = por %p135, %p136
      %p138 = scmp.ne.s32.totalorder %s130, %s133
      %p139 = scmp.eq.s32.totalorder %s21, 0
      %p140 = por %p138, %p139
      %p141 = scmp.ne.s32.totalorder %s130, %s133
      %p142 = scmp.eq.s32.totalorder %s26, 1
      %p143 = por %p141, %p142
      %p144 = scmp.ne.s32.totalorder %s133, %s134
      %p145 = scmp.eq.s32.totalorder %s26, 0
      %p146 = por %p144, %p145
      %p147 = scmp.ne.s32.totalorder %s133, %s134
      %p148 = scmp.eq.s32.totalorder %s27, 1
      %p149 = por %p147, %p148
      %p151 = scmp.ne.s32.totalorder %s134, %s150
      %p152 = scmp.eq.s32.totalorder %s27, 0
      %p153 = por %p151, %p152
      %p154 = scmp.le.s32.totalorder 1, %s21
      %p155 = scmp.lt.s32.totalorder %s21, 3
      %p156 = pnand %p154, %p155
      %p157 = pneg %p156
      // Predicated region
      $region9: #{graph_conv_forward.6} parent=5 // pred_check
        _
      $region10: #{graph_conv_forward.6} parent=5 // pred_check_branch
        %159 = sbr.rel (%p156) target = $region12
      $region11: #{graph_conv_forward.6} parent=5 // pred_region
        %s160 = ssub.s32 %s21, 1
        // Predicated region
        $region13: #{graph_conv_forward.6} parent=11 // pred_check
          %p161 = pneg %p68
        $region14: #{graph_conv_forward.6} parent=11 // pred_check_branch
          %163 = sbr.rel (%p161) target = $region16
        $region15: #{graph_conv_forward.6} parent=11 // pred_region
          %s165 = ssub.s32 128, 128
          %166 = vsyncadd [#allocation6], %s165
          %s167 = sshll.u32 [#allocation5], 4
          %s168 = int_to_ptr.vmem [resolvable:$true] %s167
          %173 = dma.hbm_to_vmem [thread:$0]  %s1, 128, %s168, [#allocation6], 64, 64, 4
        $region16: #{graph_conv_forward.6} parent=11 // pred_fallthru
          _
      $region12: #{graph_conv_forward.6} parent=5 // pred_fallthru
        _
      %p174 = scmp.lt.s32.totalorder %s21, 2
      // Predicated region
      $region17: #{graph_conv_forward.6} parent=5 // pred_check
        %p175 = pneg %p174
      $region18: #{graph_conv_forward.6} parent=5 // pred_check_branch
        %177 = sbr.rel (%p175) target = $region20
      $region19: #{graph_conv_forward.6} parent=5 // pred_region
        // Predicated region
        $region21: #{graph_conv_forward.6} parent=19 // pred_check
          %p178 = pneg %p41
        $region22: #{graph_conv_forward.6} parent=19 // pred_check_branch
          %180 = sbr.rel (%p178) target = $region24
        $region23: #{graph_conv_forward.6} parent=19 // pred_region
          %s181 = sand.u32 %s31, 1
          %s182 = scalar_lea.sflag [#allocation3], %s181
          %s183 = sand.u32 %s31, 1
          %s184 = smul.addr %s183, 64
          %s185 = scalar_lea.vmem [#allocation2], %s184
          %s186 = smul.u32 16, %s21
          %s188 = ssub.s32 1024, 1024
          %189 = vsyncadd %s182, %s188
          %s190 = smul.addr %s186, 64
          %s191 = scalar_lea.hbm %s0, %s190
          %s192 = sshll.u32 %s185, 4
          %s193 = int_to_ptr.vmem [resolvable:$true] %s192
          %198 = dma.hbm_to_vmem [thread:$0]  %s191, 1024, %s193, %s182, 64, 64, 4
        $region24: #{graph_conv_forward.6} parent=19 // pred_fallthru
          _
      $region20: #{graph_conv_forward.6} parent=5 // pred_fallthru
        _
      %p199 = scmp.le.s32.totalorder 1, %s21
      %p200 = scmp.lt.s32.totalorder %s21, 3
      %p201 = pnand %p199, %p200
      %p202 = pneg %p201
      // Predicated region
      $region25: #{graph_conv_forward.6} parent=5 // pred_check
        _
      $region26: #{graph_conv_forward.6} parent=5 // pred_check_branch
        %204 = sbr.rel (%p201) target = $region28
      $region27: #{graph_conv_forward.6} parent=5 // pred_region
        %s205 = ssub.s32 %s21, 1
        %s206 = sand.u32 %s34, 1
        %s207 = scalar_lea.sflag [#allocation3], %s206
        %s208 = sand.u32 %s34, 1
        %s209 = smul.addr %s208, 64
        %s210 = scalar_lea.vmem [#allocation2], %s209
        // Predicated region
        $region29: #{graph_conv_forward.6} parent=27 // pred_check
          %p211 = pneg %p47
        $region30: #{graph_conv_forward.6} parent=27 // pred_check_branch
          %213 = sbr.rel (%p211) target = $region32
        $region31: #{graph_conv_forward.6} parent=27 // pred_region
          %214 = dma.done %s207, 1024
        $region32: #{graph_conv_forward.6} parent=27 // pred_fallthru
          _
        // Predicated region
        $region33: #{graph_conv_forward.6} parent=27 // pred_check
          %p215 = pneg %p68
        $region34: #{graph_conv_forward.6} parent=27 // pred_check_branch
          %217 = sbr.rel (%p215) target = $region36
        $region35: #{graph_conv_forward.6} parent=27 // pred_region
          %218 = dma.done [#allocation6], 128
        $region36: #{graph_conv_forward.6} parent=27 // pred_fallthru
          _
        %s219 = sand.u32 %s34, 1
        %s220 = scalar_lea.sflag [#allocation3], %s219
        %s221 = sand.u32 %s34, 1
        %s222 = smul.addr %s221, 64
        %s223 = scalar_lea.vmem [#allocation2], %s222
        %p224 = pneg %p47
        %p225 = pneg %p44
        %p226 = pneg %p68
        %p227 = pneg %p65
        %p228 = pneg %p94
        %p229 = pneg %p91
        %s230 = sand.u32 %s81, 1
        %s231 = scalar_lea.sflag [#allocation4], %s230
        %s232 = sand.u32 %s81, 1
        %s233 = smul.addr %s232, 64
        %s234 = scalar_lea.vmem [#allocation7], %s233
        %p235 = pneg %p120
        %p236 = pneg %p117
        %s237 = sand.u32 %s26, 1
        %s238 = scalar_lea.sflag [#allocation9], %s237
        %s239 = sand.u32 %s107, 1
        %s240 = scalar_lea.vmem [#allocation8], %s239
        %p241 = pneg %p146
        %p242 = pneg %p143
        %s243 = sand.u32 %s26, 1
        %s244 = scalar_lea.sflag [#allocation9], %s243
        %s245 = sand.u32 %s133, 1
        %s246 = scalar_lea.vmem [#allocation10], %s245
        %s247 = smul.u32 16, %s26
        %s248 = smul.u32 16, %s26
        %v250 = vld [vmem:[%s210] sm:$0xf]
        %v251 = vld [vmem:[%s210 + $0x4] sm:$0xf]
        %v252 = vld [vmem:[%s210 + $0x8] sm:$0xf]
        %v253 = vld [vmem:[%s210 + $0xc] sm:$0xf]
        %v254 = vld [vmem:[%s210 + $0x10] sm:$0xf]
        %v255 = vld [vmem:[%s210 + $0x14] sm:$0xf]
        %v256 = vld [vmem:[%s210 + $0x18] sm:$0xf]
        %v257 = vld [vmem:[%s210 + $0x1c] sm:$0xf]
        %v258 = vld [vmem:[%s210 + $0x20] sm:$0xf]
        %v259 = vld [vmem:[%s210 + $0x24] sm:$0xf]
        %v260 = vld [vmem:[%s210 + $0x28] sm:$0xf]
        %v261 = vld [vmem:[%s210 + $0x2c] sm:$0xf]
        %v262 = vld [vmem:[%s210 + $0x30] sm:$0xf]
        %v263 = vld [vmem:[%s210 + $0x34] sm:$0xf]
        %v264 = vld [vmem:[%s210 + $0x38] sm:$0xf]
        %v265 = vld [vmem:[%s210 + $0x3c] sm:$0xf]
        %v266 = vld [vmem:[#allocation5] sm:$0xf]
        %v267 = vld [vmem:[#allocation5 + $0x4] sm:$0xf]
        %v284 = vunpack.c.l.b16 %v250
        %v285 = vunpack.c.l.b16 %v251
        %v286 = vunpack.c.l.b16 %v252
        %v287 = vunpack.c.l.b16 %v253
        %v288 = vunpack.c.l.b16 %v254
        %v289 = vunpack.c.l.b16 %v255
        %v290 = vunpack.c.l.b16 %v256
        %v291 = vunpack.c.l.b16 %v257
        %v292 = vunpack.c.l.b16 %v258
        %v293 = vunpack.c.l.b16 %v259
        %v294 = vunpack.c.l.b16 %v260
        %v295 = vunpack.c.l.b16 %v261
        %v296 = vunpack.c.l.b16 %v262
        %v297 = vunpack.c.l.b16 %v263
        %v298 = vunpack.c.l.b16 %v264
        %v299 = vunpack.c.l.b16 %v265
        %v300 = vpack.c.b16 %v285, %v284
        %v301 = vpack.c.b16 %v287, %v286
        %v302 = vpack.c.b16 %v289, %v288
        %v303 = vpack.c.b16 %v291, %v290
        %v304 = vpack.c.b16 %v293, %v292
        %v305 = vpack.c.b16 %v295, %v294
        %v306 = vpack.c.b16 %v297, %v296
        %v307 = vpack.c.b16 %v299, %v298
        %v310 = vunpack.c.l.b16 %v266
        %v311 = vunpack.c.l.b16 %v267
        %v312 = vpack.c.b16 %v311, %v310
        %vm314 = vcmask 130048
        %v316 = vsel %vm314, %v300, 0
        %v319 = vsel %vm314, %v301, 0
        %v322 = vsel %vm314, %v302, 0
        %v325 = vsel %vm314, %v303, 0
        %v328 = vsel %vm314, %v304, 0
        %v331 = vsel %vm314, %v305, 0
        %v334 = vsel %vm314, %v306, 0
        %v337 = vsel %vm314, %v307, 0
        %339 = vmatprep.subr.bf16.mxu0 0
        %340 = vmatpush1.bf16.msra.mxu0 %v312
        %341 = vmatprep.subr.bf16.mxu0 0
        %342 = vmatpush1.bf16.msra.mxu0 0
        %343 = vmatprep.subr.bf16.mxu0 0
        %344 = vmatpush1.bf16.msra.mxu0 0
        %345 = vmatprep.subr.bf16.mxu0 0
        %346 = vmatpush1.bf16.msra.mxu0 0
        %347 = vmatprep.subr.bf16.mxu0 0
        %348 = vmatpush1.bf16.msra.mxu0 0
        %349 = vmatprep.subr.bf16.mxu0 0
        %350 = vmatpush1.bf16.msra.mxu0 0
        %351 = vmatprep.subr.bf16.mxu0 0
        %352 = vmatpush1.bf16.msra.mxu0 0
        %353 = vmatprep.subr.bf16.mxu0 0
        %354 = vmatpush1.bf16.msra.mxu0 0
        %355 = vmatprep.subr.bf16.mxu0 0
        %356 = vmatpush1.bf16.msra.mxu0 0
        %357 = vmatprep.subr.bf16.mxu0 0
        %358 = vmatpush1.bf16.msra.mxu0 0
        %359 = vmatprep.subr.bf16.mxu0 0
        %360 = vmatpush1.bf16.msra.mxu0 0
        %361 = vmatprep.subr.bf16.mxu0 0
        %362 = vmatpush1.bf16.msra.mxu0 0
        %363 = vmatprep.subr.bf16.mxu0 0
        %364 = vmatpush1.bf16.msra.mxu0 0
        %365 = vmatprep.subr.bf16.mxu0 0
        %366 = vmatpush1.bf16.msra.mxu0 0
        %367 = vmatprep.subr.bf16.mxu0 0
        %368 = vmatpush1.bf16.msra.mxu0 0
        %369 = vmatprep.subr.bf16.mxu0 0
        %370 = vmatpush1.bf16.msra.mxu0 0
        %371 = vmatprep.mubr.bf16.mxu0 0
        %372 = vmatmul.mubr.bf16.gmra.mrb[0].mxu0 %v316
        %v373 = vpop.f32.mrb[0].mxu0
        %v374 = vadd.f32 0.0, %v373
        %v375 = vpop.f32.mrb[0].mxu0
        %v376 = vpop.f32.mrb[0].mxu0
        %v377 = vadd.f32 0.0, %v376
        %v378 = vpop.f32.mrb[0].mxu0
        %379 = vmatprep.mubr.bf16.mxu0 0
        %380 = vmatmul.mubr.bf16.gmra.mrb[0].mxu0 %v319
        %v381 = vpop.f32.mrb[0].mxu0
        %v382 = vadd.f32 0.0, %v381
        %v383 = vpop.f32.mrb[0].mxu0
        %v384 = vpop.f32.mrb[0].mxu0
        %v385 = vadd.f32 0.0, %v384
        %v386 = vpop.f32.mrb[0].mxu0
        %387 = vmatprep.mubr.bf16.mxu0 0
        %388 = vmatmul.mubr.bf16.gmra.mrb[0].mxu0 %v322
        %v389 = vpop.f32.mrb[0].mxu0
        %v390 = vadd.f32 0.0, %v389
        %v391 = vpop.f32.mrb[0].mxu0
        %v392 = vpop.f32.mrb[0].mxu0
        %v393 = vadd.f32 0.0, %v392
        %v394 = vpop.f32.mrb[0].mxu0
        %395 = vmatprep.mubr.bf16.mxu0 0
        %396 = vmatmul.mubr.bf16.gmra.mrb[0].mxu0 %v325
        %v397 = vpop.f32.mrb[0].mxu0
        %v398 = vadd.f32 0.0, %v397
        %v399 = vpop.f32.mrb[0].mxu0
        %v400 = vpop.f32.mrb[0].mxu0
        %v401 = vadd.f32 0.0, %v400
        %v402 = vpop.f32.mrb[0].mxu0
        %403 = vmatprep.mubr.bf16.mxu0 0
        %404 = vmatmul.mubr.bf16.gmra.mrb[0].mxu0 %v328
        %v405 = vpop.f32.mrb[0].mxu0
        %v406 = vadd.f32 0.0, %v405
        %v407 = vpop.f32.mrb[0].mxu0
        %v408 = vpop.f32.mrb[0].mxu0
        %v409 = vadd.f32 0.0, %v408
        %v410 = vpop.f32.mrb[0].mxu0
        %411 = vmatprep.mubr.bf16.mxu0 0
        %412 = vmatmul.mubr.bf16.gmra.mrb[0].mxu0 %v331
        %v413 = vpop.f32.mrb[0].mxu0
        %v414 = vadd.f32 0.0, %v413
        %v415 = vpop.f32.mrb[0].mxu0
        %v416 = vpop.f32.mrb[0].mxu0
        %v417 = vadd.f32 0.0, %v416
        %v418 = vpop.f32.mrb[0].mxu0
        %419 = vmatprep.mubr.bf16.mxu0 0
        %420 = vmatmul.mubr.bf16.gmra.mrb[0].mxu0 %v334
        %v421 = vpop.f32.mrb[0].mxu0
        %v422 = vadd.f32 0.0, %v421
        %v423 = vpop.f32.mrb[0].mxu0
        %v424 = vpop.f32.mrb[0].mxu0
        %v425 = vadd.f32 0.0, %v424
        %v426 = vpop.f32.mrb[0].mxu0
        %427 = vmatprep.mubr.bf16.mxu0 0
        %428 = vmatmul.mubr.bf16.gmra.mrb[0].mxu0 %v337
        %v429 = vpop.f32.mrb[0].mxu0
        %v430 = vadd.f32 0.0, %v429
        %v431 = vpop.f32.mrb[0].mxu0
        %v432 = vpop.f32.mrb[0].mxu0
        %v433 = vadd.f32 0.0, %v432
        %v434 = vpop.f32.mrb[0].mxu0
        %435 = vdwg.mxu0
        %v436 = vpack.c.bf16 %v377, %v374
        %v437 = vpack.c.bf16 %v385, %v382
        %v438 = vpack.c.bf16 %v393, %v390
        %v439 = vpack.c.bf16 %v401, %v398
        %v440 = vpack.c.bf16 %v409, %v406
        %v441 = vpack.c.bf16 %v417, %v414
        %v442 = vpack.c.bf16 %v425, %v422
        %v443 = vpack.c.bf16 %v433, %v430
        %v452 = vunpack.c.l.b16 %v436
        %v453 = vunpack.c.h.b16 %v436
        %v454 = vunpack.c.l.b16 %v437
        %v455 = vunpack.c.h.b16 %v437
        %v456 = vunpack.c.l.b16 %v438
        %v457 = vunpack.c.h.b16 %v438
        %v458 = vunpack.c.l.b16 %v439
        %v459 = vunpack.c.h.b16 %v439
        %v460 = vunpack.c.l.b16 %v440
        %v461 = vunpack.c.h.b16 %v440
        %v462 = vunpack.c.l.b16 %v441
        %v463 = vunpack.c.h.b16 %v441
        %v464 = vunpack.c.l.b16 %v442
        %v465 = vunpack.c.h.b16 %v442
        %v466 = vunpack.c.l.b16 %v443
        %v467 = vunpack.c.h.b16 %v443
        %v468 = vpack.c.b16 %v452, %v452
        %v469 = vpack.c.b16 %v453, %v453
        %v470 = vpack.c.b16 %v454, %v454
        %v471 = vpack.c.b16 %v455, %v455
        %v472 = vpack.c.b16 %v456, %v456
        %v473 = vpack.c.b16 %v457, %v457
        %v474 = vpack.c.b16 %v458, %v458
        %v475 = vpack.c.b16 %v459, %v459
        %v476 = vpack.c.b16 %v460, %v460
        %v477 = vpack.c.b16 %v461, %v461
        %v478 = vpack.c.b16 %v462, %v462
        %v479 = vpack.c.b16 %v463, %v463
        %v480 = vpack.c.b16 %v464, %v464
        %v481 = vpack.c.b16 %v465, %v465
        %v482 = vpack.c.b16 %v466, %v466
        %v483 = vpack.c.b16 %v467, %v467
        %500 = vst [vmem:[%s234] sm:$0xf] %v468
        %501 = vst [vmem:[%s234 + $0x4] sm:$0xf] %v469
        %502 = vst [vmem:[%s234 + $0x8] sm:$0xf] %v470
        %503 = vst [vmem:[%s234 + $0xc] sm:$0xf] %v471
        %504 = vst [vmem:[%s234 + $0x10] sm:$0xf] %v472
        %505 = vst [vmem:[%s234 + $0x14] sm:$0xf] %v473
        %506 = vst [vmem:[%s234 + $0x18] sm:$0xf] %v474
        %507 = vst [vmem:[%s234 + $0x1c] sm:$0xf] %v475
        %508 = vst [vmem:[%s234 + $0x20] sm:$0xf] %v476
        %509 = vst [vmem:[%s234 + $0x24] sm:$0xf] %v477
        %510 = vst [vmem:[%s234 + $0x28] sm:$0xf] %v478
        %511 = vst [vmem:[%s234 + $0x2c] sm:$0xf] %v479
        %512 = vst [vmem:[%s234 + $0x30] sm:$0xf] %v480
        %513 = vst [vmem:[%s234 + $0x34] sm:$0xf] %v481
        %514 = vst [vmem:[%s234 + $0x38] sm:$0xf] %v482
        %515 = vst [vmem:[%s234 + $0x3c] sm:$0xf] %v483
        %v516 = vadd.f32 %v374, %v377
        %v517 = vadd.f32 %v516, %v382
        %v518 = vadd.f32 %v517, %v385
        %v519 = vadd.f32 %v518, %v390
        %v520 = vadd.f32 %v519, %v393
        %v521 = vadd.f32 %v520, %v398
        %v522 = vadd.f32 %v521, %v401
        %v523 = vadd.f32 %v522, %v406
        %v524 = vadd.f32 %v523, %v409
        %v525 = vadd.f32 %v524, %v414
        %v526 = vadd.f32 %v525, %v417
        %v527 = vadd.f32 %v526, %v422
        %v528 = vadd.f32 %v527, %v425
        %v529 = vadd.f32 %v528, %v430
        %v530 = vadd.f32 %v529, %v433
        %v531 = vrot.slane %v530, 4
        %v532 = vadd.f32 %v530, %v531
        %v533 = vrot.slane %v532, 2
        %v534 = vadd.f32 %v532, %v533
        %v535 = vrot.slane %v534, 1
        %v536 = vadd.f32 %v534, %v535
        %537 = vst [vmem:[%s240] sm:$0x1] %v536
        %v538 = vmul.f32 %v374, %v374
        %v539 = vmul.f32 %v377, %v377
        %v540 = vmul.f32 %v382, %v382
        %v541 = vmul.f32 %v385, %v385
        %v542 = vmul.f32 %v390, %v390
        %v543 = vmul.f32 %v393, %v393
        %v544 = vmul.f32 %v398, %v398
        %v545 = vmul.f32 %v401, %v401
        %v546 = vmul.f32 %v406, %v406
        %v547 = vmul.f32 %v409, %v409
        %v548 = vmul.f32 %v414, %v414
        %v549 = vmul.f32 %v417, %v417
        %v550 = vmul.f32 %v422, %v422
        %v551 = vmul.f32 %v425, %v425
        %v552 = vmul.f32 %v430, %v430
        %v553 = vmul.f32 %v433, %v433
        %v554 = vadd.f32 %v538, %v539
        %v555 = vadd.f32 %v554, %v540
        %v556 = vadd.f32 %v555, %v541
        %v557 = vadd.f32 %v556, %v542
        %v558 = vadd.f32 %v557, %v543
        %v559 = vadd.f32 %v558, %v544
        %v560 = vadd.f32 %v559, %v545
        %v561 = vadd.f32 %v560, %v546
        %v562 = vadd.f32 %v561, %v547
        %v563 = vadd.f32 %v562, %v548
        %v564 = vadd.f32 %v563, %v549
        %v565 = vadd.f32 %v564, %v550
        %v566 = vadd.f32 %v565, %v551
        %v567 = vadd.f32 %v566, %v552
        %v568 = vadd.f32 %v567, %v553
        %v569 = vrot.slane %v568, 4
        %v570 = vadd.f32 %v568, %v569
        %v571 = vrot.slane %v570, 2
        %v572 = vadd.f32 %v570, %v571
        %v573 = vrot.slane %v572, 1
        %v574 = vadd.f32 %v572, %v573
        %575 = vst [vmem:[%s246] sm:$0x1] %v574
        %s576 = sand.u32 %s81, 1
        %s577 = scalar_lea.sflag [#allocation4], %s576
        %s578 = sand.u32 %s81, 1
        %s579 = smul.addr %s578, 64
        %s580 = scalar_lea.vmem [#allocation7], %s579
        %s581 = sand.u32 %s26, 1
        %s582 = scalar_lea.sflag [#allocation9], %s581
        %s583 = sand.u32 %s107, 1
        %s584 = scalar_lea.vmem [#allocation8], %s583
        %s585 = sand.u32 %s26, 1
        %s586 = scalar_lea.sflag [#allocation9], %s585
        %s587 = sand.u32 %s133, 1
        %s588 = scalar_lea.vmem [#allocation10], %s587
        // Predicated region
        $region37: #{graph_conv_forward.6} parent=27 // pred_check
          %p589 = pneg %p91
        $region38: #{graph_conv_forward.6} parent=27 // pred_check_branch
          %591 = sbr.rel (%p589) target = $region40
        $region39: #{graph_conv_forward.6} parent=27 // pred_region
          %s592 = smul.u32 16, %s26
          %s594 = ssub.s32 1024, 1024
          %595 = vsyncadd %s577, %s594
          %s596 = smul.addr %s592, 64
          %s597 = scalar_lea.hbm %s2, %s596
          %s598 = sshll.u32 %s580, 4
          %s599 = int_to_ptr.vmem [resolvable:$true] %s598
          %604 = dma.vmem_to_hbm [thread:$0]  %s599, 1024, %s597, %s577, 64, 64, 4
        $region40: #{graph_conv_forward.6} parent=27 // pred_fallthru
          _
        // Predicated region
        $region41: #{graph_conv_forward.6} parent=27 // pred_check
          %p605 = pneg %p117
        $region42: #{graph_conv_forward.6} parent=27 // pred_check_branch
          %607 = sbr.rel (%p605) target = $region44
        $region43: #{graph_conv_forward.6} parent=27 // pred_region
          %s609 = ssub.s32 16, 16
          %610 = vsyncadd %s582, %s609
          %s611 = smul.addr %s26, 16
          %s612 = scalar_lea.hbm %s3, %s611
          %s614 = sshll.u32 %s584, 4
          %s615 = int_to_ptr.vmem [resolvable:$true] %s614
          %617 = dma.vmem_to_hbm [thread:$0]  %s615, 16, %s612, %s582
        $region44: #{graph_conv_forward.6} parent=27 // pred_fallthru
          _
        // Predicated region
        $region45: #{graph_conv_forward.6} parent=27 // pred_check
          %p618 = pneg %p143
        $region46: #{graph_conv_forward.6} parent=27 // pred_check_branch
          %620 = sbr.rel (%p618) target = $region48
        $region47: #{graph_conv_forward.6} parent=27 // pred_region
          %s622 = ssub.s32 16, 16
          %623 = vsyncadd %s586, %s622
          %s624 = smul.addr %s26, 16
          %s625 = scalar_lea.hbm %s4, %s624
          %s627 = sshll.u32 %s588, 4
          %s628 = int_to_ptr.vmem [resolvable:$true] %s627
          %630 = dma.vmem_to_hbm [thread:$0]  %s628, 16, %s625, %s586
        $region48: #{graph_conv_forward.6} parent=27 // pred_fallthru
          _
      $region28: #{graph_conv_forward.6} parent=5 // pred_fallthru
        _
      %p631 = scmp.le.s32.totalorder 2, %s21
      // Predicated region
      $region49: #{graph_conv_forward.6} parent=5 // pred_check
        %p632 = pneg %p631
      $region50: #{graph_conv_forward.6} parent=5 // pred_check_branch
        %634 = sbr.rel (%p632) target = $region52
      $region51: #{graph_conv_forward.6} parent=5 // pred_region
        %s635 = ssub.s32 %s21, 2
        // Predicated region
        $region53: #{graph_conv_forward.6} parent=51 // pred_check
          %p636 = pneg %p97
        $region54: #{graph_conv_forward.6} parent=51 // pred_check_branch
          %638 = sbr.rel (%p636) target = $region56
        $region55: #{graph_conv_forward.6} parent=51 // pred_region
          %s639 = sand.u32 %s82, 1
          %s640 = scalar_lea.sflag [#allocation4], %s639
          %s641 = sand.u32 %s82, 1
          %s642 = smul.addr %s641, 64
          %s643 = scalar_lea.vmem [#allocation7], %s642
          %644 = dma.done %s640, 1024
        $region56: #{graph_conv_forward.6} parent=51 // pred_fallthru
          _
        // Predicated region
        $region57: #{graph_conv_forward.6} parent=51 // pred_check
          %p645 = pneg %p123
        $region58: #{graph_conv_forward.6} parent=51 // pred_check_branch
          %647 = sbr.rel (%p645) target = $region60
        $region59: #{graph_conv_forward.6} parent=51 // pred_region
          %s648 = sand.u32 %s27, 1
          %s649 = scalar_lea.sflag [#allocation9], %s648
          %s650 = sand.u32 %s108, 1
          %s651 = scalar_lea.vmem [#allocation8], %s650
          %652 = dma.done %s649, 16
        $region60: #{graph_conv_forward.6} parent=51 // pred_fallthru
          _
        // Predicated region
        $region61: #{graph_conv_forward.6} parent=51 // pred_check
          %p653 = pneg %p149
        $region62: #{graph_conv_forward.6} parent=51 // pred_check_branch
          %655 = sbr.rel (%p653) target = $region64
        $region63: #{graph_conv_forward.6} parent=51 // pred_region
          %s656 = sand.u32 %s27, 1
          %s657 = scalar_lea.sflag [#allocation9], %s656
          %s658 = sand.u32 %s134, 1
          %s659 = scalar_lea.vmem [#allocation10], %s658
          %660 = dma.done %s657, 16
        $region64: #{graph_conv_forward.6} parent=51 // pred_fallthru
          _
      $region52: #{graph_conv_forward.6} parent=5 // pred_fallthru
        _
    $region6: #{graph_conv_forward.6} parent=1 // loop_footer
      %s25 = sadd.s32 1, %s21
    $region7: #{graph_conv_forward.6} parent=1 // loop_footer_branch
      %20 = sbr.rel target = $region3
    $region8: #{graph_conv_forward.6} parent=1 // loop_exit
      _
    %661 = vsyncpa [#allocation3], 1
    %s662 = scalar_lea.sflag [#allocation3], 1
    %663 = vsyncpa %s662, 1
    %664 = vsyncpa [#allocation6], 1
    %665 = vsyncpa [#allocation4], 1
    %s666 = scalar_lea.sflag [#allocation4], 1
    %667 = vsyncpa %s666, 1
    %668 = vsyncpa [#allocation9], 1
    %s669 = scalar_lea.sflag [#allocation9], 1
    %670 = vsyncpa %s669, 1

// kernel: graph_conv_forward.7
$region0: #{graph_conv_forward.7}
  #allocation0 [shape = 'u32[]', space=smem, size = 0x4, offset = 0x4, fixed_abs, tag = 'smem constant byte address 0x4 - core index']
  #allocation1 [shape = 'u32[144,128]{1,0:T(1,128)}', space=vmem, size = 0x12000, scoped, tag = 'internal scratch']
  %s0 = inlined_call_operand.hbm [shape: bf16[256,128], index: 0, kind: input, shape index: {}]
  %s1 = inlined_call_operand.hbm [shape: f32[1,128], index: 1, kind: input, shape index: {}]
  %s2 = inlined_call_operand.hbm [shape: f32[1,128], index: 2, kind: input, shape index: {}]
  %s3 = inlined_call_operand.hbm [shape: bf16[256,128], index: 3, kind: output, shape index: {}]
  %s4 = sld [smem:[#allocation0]]
  $region57: #{graph_conv_forward.7} parent=0
    _
  %s6 = ssub.s32 1, %s4
  %s7 = scalar_select 0, %s6, %s4
  $region1: #{graph_conv_forward.7} parent=0
    #allocation2 [shape = 'u8[65536]{0}', space=vmem, size = 0x10000, scoped, tag = 'input window, operand 0']
    #allocation3 [shape = 's32[2]{0}', space=sflag, size = 0x8, scoped, tag = 'scoped memory for graph_conv_forward.7']
    #allocation4 [shape = 's32[2]{0}', space=sflag, size = 0x8, scoped, tag = 'scoped memory for graph_conv_forward.7']
    #allocation5 [shape = 'u8[512]{0}', space=vmem, size = 0x400, scoped, tag = 'input window, operand 1, single buffered']
    #allocation6 [shape = 's32[1]{0}', space=sflag, size = 0x4, scoped, tag = 'scoped memory for graph_conv_forward.7']
    #allocation7 [shape = 'u8[512]{0}', space=vmem, size = 0x400, scoped, tag = 'input window, operand 2, single buffered']
    #allocation8 [shape = 'u8[65536]{0}', space=vmem, size = 0x10000, scoped, tag = 'output window, operand 0']
    %8 = vsyncpa [#allocation3], 0
    %s9 = scalar_lea.sflag [#allocation3], 1
    %10 = vsyncpa %s9, 0
    %11 = vsyncpa [#allocation6], 0
    %12 = vsyncpa [#allocation4], 0
    %s13 = scalar_lea.sflag [#allocation4], 1
    %14 = vsyncpa %s13, 0
    loop: start=0, step=1, limit=4
    $region2: #{graph_conv_forward.7} parent=1 // loop_pre_header
      _
    $region3: #{graph_conv_forward.7} parent=1 // loop_header
      %s16 = sphi 0, %s20
      %p17 = scmp.ge.s32.totalorder %s16, 4
      %s26 = sphi 0, %s28
      %s29 = sphi 0, %s26
      %s30 = sphi 0, %s29
      %s46 = sphi 0, %s30
      %s50 = sphi 0, %s50
      %s52 = sphi 0, %s50
      %s53 = sphi 0, %s52
      %s67 = sphi 0, %s53
      %s71 = sphi 0, %s71
      %s73 = sphi 0, %s71
      %s74 = sphi 0, %s73
      %s88 = sphi 0, %s74
      %s94 = sphi 0, %s96
      %s97 = sphi 0, %s94
      %s98 = sphi 0, %s97
      %s114 = sphi 0, %s98
    $region4: #{graph_conv_forward.7} parent=1 // loop_header_branch
      %19 = sbr.rel (%p17) target = $region8
    $region5: #{graph_conv_forward.7} parent=1 // loop_body
      %s21 = ssub.s32 %s16, 1
      %s22 = ssub.s32 %s16, 2
      %s23 = sadd.s32 %s16, 1
      %s24 = ssub.s32 %s16, %s23
      %p25 = scmp.eq.s32.totalorder %s24, 0
      %s27 = sadd.s32 %s26, 1
      %s28 = scalar_select %p25, %s26, %s27
      %p31 = pneg %p25
      %p32 = scmp.eq.s32.totalorder %s16, 1
      %p33 = por %p31, %p32
      %p34 = scmp.ne.s32.totalorder %s26, %s29
      %p35 = scmp.eq.s32.totalorder %s16, 0
      %p36 = por %p34, %p35
      %p37 = scmp.ne.s32.totalorder %s26, %s29
      %p38 = scmp.eq.s32.totalorder %s21, 1
      %p39 = por %p37, %p38
      %p40 = scmp.ne.s32.totalorder %s29, %s30
      %p41 = scmp.eq.s32.totalorder %s21, 0
      %p42 = por %p40, %p41
      %p43 = scmp.ne.s32.totalorder %s29, %s30
      %p44 = scmp.eq.s32.totalorder %s22, 1
      %p45 = por %p43, %p44
      %p47 = scmp.ne.s32.totalorder %s30, %s46
      %p48 = scmp.eq.s32.totalorder %s22, 0
      %p49 = por %p47, %p48
      %s51 = sadd.s32 %s50, 1
      %p54 = scmp.eq.s32.totalorder %s16, 1
      %p55 = scmp.ne.s32.totalorder %s50, %s52
      %p56 = scmp.eq.s32.totalorder %s16, 0
      %p57 = por %p55, %p56
      %p58 = scmp.ne.s32.totalorder %s50, %s52
      %p59 = scmp.eq.s32.totalorder %s21, 1
      %p60 = por %p58, %p59
      %p61 = scmp.ne.s32.totalorder %s52, %s53
      %p62 = scmp.eq.s32.totalorder %s21, 0
      %p63 = por %p61, %p62
      %p64 = scmp.ne.s32.totalorder %s52, %s53
      %p65 = scmp.eq.s32.totalorder %s22, 1
      %p66 = por %p64, %p65
      %p68 = scmp.ne.s32.totalorder %s53, %s67
      %p69 = scmp.eq.s32.totalorder %s22, 0
      %p70 = por %p68, %p69
      %s72 = sadd.s32 %s71, 1
      %p75 = scmp.eq.s32.totalorder %s16, 1
      %p76 = scmp.ne.s32.totalorder %s71, %s73
      %p77 = scmp.eq.s32.totalorder %s16, 0
      %p78 = por %p76, %p77
      %p79 = scmp.ne.s32.totalorder %s71, %s73
      %p80 = scmp.eq.s32.totalorder %s21, 1
      %p81 = por %p79, %p80
      %p82 = scmp.ne.s32.totalorder %s73, %s74
      %p83 = scmp.eq.s32.totalorder %s21, 0
      %p84 = por %p82, %p83
      %p85 = scmp.ne.s32.totalorder %s73, %s74
      %p86 = scmp.eq.s32.totalorder %s22, 1
      %p87 = por %p85, %p86
      %p89 = scmp.ne.s32.totalorder %s74, %s88
      %p90 = scmp.eq.s32.totalorder %s22, 0
      %p91 = por %p89, %p90
      %s92 = ssub.s32 %s16, %s23
      %p93 = scmp.eq.s32.totalorder %s92, 0
      %s95 = sadd.s32 %s94, 1
      %s96 = scalar_select %p93, %s94, %s95
      %p99 = pneg %p93
      %p100 = scmp.eq.s32.totalorder %s16, 1
      %p101 = por %p99, %p100
      %p102 = scmp.ne.s32.totalorder %s94, %s97
      %p103 = scmp.eq.s32.totalorder %s16, 0
      %p104 = por %p102, %p103
      %p105 = scmp.ne.s32.totalorder %s94, %s97
      %p106 = scmp.eq.s32.totalorder %s21, 1
      %p107 = por %p105, %p106
      %p108 = scmp.ne.s32.totalorder %s97, %s98
      %p109 = scmp.eq.s32.totalorder %s21, 0
      %p110 = por %p108, %p109
      %p111 = scmp.ne.s32.totalorder %s97, %s98
      %p112 = scmp.eq.s32.totalorder %s22, 1
      %p113 = por %p111, %p112
      %p115 = scmp.ne.s32.totalorder %s98, %s114
      %p116 = scmp.eq.s32.totalorder %s22, 0
      %p117 = por %p115, %p116
      %p118 = scmp.le.s32.totalorder 1, %s16
      %p119 = scmp.lt.s32.totalorder %s16, 3
      %p120 = pnand %p118, %p119
      %p121 = pneg %p120
      // Predicated region
      $region9: #{graph_conv_forward.7} parent=5 // pred_check
        _
      $region10: #{graph_conv_forward.7} parent=5 // pred_check_branch
        %123 = sbr.rel (%p120) target = $region12
      $region11: #{graph_conv_forward.7} parent=5 // pred_region
        %s124 = ssub.s32 %s16, 1
        // Predicated region
        $region13: #{graph_conv_forward.7} parent=11 // pred_check
          %p125 = pneg %p63
        $region14: #{graph_conv_forward.7} parent=11 // pred_check_branch
          %127 = sbr.rel (%p125) target = $region16
        $region15: #{graph_conv_forward.7} parent=11 // pred_region
          %s129 = ssub.s32 16, 16
          %130 = vsyncadd [#allocation6], %s129
          %s132 = sshll.u32 [#allocation5], 4
          %s133 = int_to_ptr.vmem [resolvable:$true] %s132
          %135 = dma.hbm_to_vmem [thread:$0]  %s1, 16, %s133, [#allocation6]
        $region16: #{graph_conv_forward.7} parent=11 // pred_fallthru
          _
        // Predicated region
        $region17: #{graph_conv_forward.7} parent=11 // pred_check
          %p136 = pneg %p84
        $region18: #{graph_conv_forward.7} parent=11 // pred_check_branch
          %138 = sbr.rel (%p136) target = $region20
        $region19: #{graph_conv_forward.7} parent=11 // pred_region
          %s140 = ssub.s32 16, 16
          %141 = vsyncadd [#allocation6], %s140
          %s143 = sshll.u32 [#allocation7], 4
          %s144 = int_to_ptr.vmem [resolvable:$true] %s143
          %146 = dma.hbm_to_vmem [thread:$0]  %s2, 16, %s144, [#allocation6]
        $region20: #{graph_conv_forward.7} parent=11 // pred_fallthru
          _
      $region12: #{graph_conv_forward.7} parent=5 // pred_fallthru
        _
      %p147 = scmp.lt.s32.totalorder %s16, 2
      // Predicated region
      $region21: #{graph_conv_forward.7} parent=5 // pred_check
        %p148 = pneg %p147
      $region22: #{graph_conv_forward.7} parent=5 // pred_check_branch
        %150 = sbr.rel (%p148) target = $region24
      $region23: #{graph_conv_forward.7} parent=5 // pred_region
        // Predicated region
        $region25: #{graph_conv_forward.7} parent=23 // pred_check
          %p151 = pneg %p36
        $region26: #{graph_conv_forward.7} parent=23 // pred_check_branch
          %153 = sbr.rel (%p151) target = $region28
        $region27: #{graph_conv_forward.7} parent=23 // pred_region
          %s154 = sand.u32 %s26, 1
          %s155 = scalar_lea.sflag [#allocation3], %s154
          %s156 = sand.u32 %s26, 1
          %s157 = smul.addr %s156, 64
          %s158 = scalar_lea.vmem [#allocation2], %s157
          %s159 = smul.u32 16, %s16
          %s161 = ssub.s32 1024, 1024
          %162 = vsyncadd %s155, %s161
          %s163 = smul.addr %s159, 64
          %s164 = scalar_lea.hbm %s0, %s163
          %s165 = sshll.u32 %s158, 4
          %s166 = int_to_ptr.vmem [resolvable:$true] %s165
          %171 = dma.hbm_to_vmem [thread:$0]  %s164, 1024, %s166, %s155, 64, 64, 4
        $region28: #{graph_conv_forward.7} parent=23 // pred_fallthru
          _
      $region24: #{graph_conv_forward.7} parent=5 // pred_fallthru
        _
      %p172 = scmp.le.s32.totalorder 1, %s16
      %p173 = scmp.lt.s32.totalorder %s16, 3
      %p174 = pnand %p172, %p173
      %p175 = pneg %p174
      // Predicated region
      $region29: #{graph_conv_forward.7} parent=5 // pred_check
        _
      $region30: #{graph_conv_forward.7} parent=5 // pred_check_branch
        %177 = sbr.rel (%p174) target = $region32
      $region31: #{graph_conv_forward.7} parent=5 // pred_region
        %s178 = ssub.s32 %s16, 1
        %s179 = sand.u32 %s29, 1
        %s180 = scalar_lea.sflag [#allocation3], %s179
        %s181 = sand.u32 %s29, 1
        %s182 = smul.addr %s181, 64
        %s183 = scalar_lea.vmem [#allocation2], %s182
        // Predicated region
        $region33: #{graph_conv_forward.7} parent=31 // pred_check
          %p184 = pneg %p42
        $region34: #{graph_conv_forward.7} parent=31 // pred_check_branch
          %186 = sbr.rel (%p184) target = $region36
        $region35: #{graph_conv_forward.7} parent=31 // pred_region
          %187 = dma.done %s180, 1024
        $region36: #{graph_conv_forward.7} parent=31 // pred_fallthru
          _
        // Predicated region
        $region37: #{graph_conv_forward.7} parent=31 // pred_check
          %p188 = pneg %p63
        $region38: #{graph_conv_forward.7} parent=31 // pred_check_branch
          %190 = sbr.rel (%p188) target = $region40
        $region39: #{graph_conv_forward.7} parent=31 // pred_region
          %191 = dma.done [#allocation6], 16
        $region40: #{graph_conv_forward.7} parent=31 // pred_fallthru
          _
        // Predicated region
        $region41: #{graph_conv_forward.7} parent=31 // pred_check
          %p192 = pneg %p84
        $region42: #{graph_conv_forward.7} parent=31 // pred_check_branch
          %194 = sbr.rel (%p192) target = $region44
        $region43: #{graph_conv_forward.7} parent=31 // pred_region
          %195 = dma.done [#allocation6], 16
        $region44: #{graph_conv_forward.7} parent=31 // pred_fallthru
          _
        %s196 = sand.u32 %s29, 1
        %s197 = scalar_lea.sflag [#allocation3], %s196
        %s198 = sand.u32 %s29, 1
        %s199 = smul.addr %s198, 64
        %s200 = scalar_lea.vmem [#allocation2], %s199
        %p201 = pneg %p42
        %p202 = pneg %p39
        %p203 = pneg %p63
        %p204 = pneg %p60
        %p205 = pneg %p84
        %p206 = pneg %p81
        %p207 = pneg %p110
        %p208 = pneg %p107
        %s209 = sand.u32 %s97, 1
        %s210 = scalar_lea.sflag [#allocation4], %s209
        %s211 = sand.u32 %s97, 1
        %s212 = smul.addr %s211, 64
        %s213 = scalar_lea.vmem [#allocation8], %s212
        %s214 = smul.u32 16, %s21
        %s215 = smul.u32 16, %s21
        %v216 = vld [vmem:[%s183] sm:$0xf]
        %v217 = vld [vmem:[%s183 + $0x4] sm:$0xf]
        %v218 = vld [vmem:[%s183 + $0x8] sm:$0xf]
        %v219 = vld [vmem:[%s183 + $0xc] sm:$0xf]
        %v220 = vld [vmem:[%s183 + $0x10] sm:$0xf]
        %v221 = vld [vmem:[%s183 + $0x14] sm:$0xf]
        %v222 = vld [vmem:[%s183 + $0x18] sm:$0xf]
        %v223 = vld [vmem:[%s183 + $0x1c] sm:$0xf]
        %v224 = vld [vmem:[%s183 + $0x20] sm:$0xf]
        %v225 = vld [vmem:[%s183 + $0x24] sm:$0xf]
        %v226 = vld [vmem:[%s183 + $0x28] sm:$0xf]
        %v227 = vld [vmem:[%s183 + $0x2c] sm:$0xf]
        %v228 = vld [vmem:[%s183 + $0x30] sm:$0xf]
        %v229 = vld [vmem:[%s183 + $0x34] sm:$0xf]
        %v230 = vld [vmem:[%s183 + $0x38] sm:$0xf]
        %v231 = vld [vmem:[%s183 + $0x3c] sm:$0xf]
        %v232 = vunpack.c.l.bf16 %v216
        %v233 = vunpack.c.l.bf16 %v217
        %v234 = vunpack.c.l.bf16 %v218
        %v235 = vunpack.c.l.bf16 %v219
        %v236 = vunpack.c.l.bf16 %v220
        %v237 = vunpack.c.l.bf16 %v221
        %v238 = vunpack.c.l.bf16 %v222
        %v239 = vunpack.c.l.bf16 %v223
        %v240 = vunpack.c.l.bf16 %v224
        %v241 = vunpack.c.l.bf16 %v225
        %v242 = vunpack.c.l.bf16 %v226
        %v243 = vunpack.c.l.bf16 %v227
        %v244 = vunpack.c.l.bf16 %v228
        %v245 = vunpack.c.l.bf16 %v229
        %v246 = vunpack.c.l.bf16 %v230
        %v247 = vunpack.c.l.bf16 %v231
        %v248 = vld [vmem:[#allocation5] sm:$0x1]
        %v250 = vlaneseq
        %v251 = vshrl.u32 %v250, 7
        %v252 = vsub.s32 0, %v251
        %v253 = vrot.slane %v248, %v252
        %v255 = vmul.f32 %v232, %v253
        %v256 = vmul.f32 %v233, %v253
        %v257 = vmul.f32 %v234, %v253
        %v258 = vmul.f32 %v235, %v253
        %v259 = vmul.f32 %v236, %v253
        %v260 = vmul.f32 %v237, %v253
        %v261 = vmul.f32 %v238, %v253
        %v262 = vmul.f32 %v239, %v253
        %v263 = vmul.f32 %v240, %v253
        %v264 = vmul.f32 %v241, %v253
        %v265 = vmul.f32 %v242, %v253
        %v266 = vmul.f32 %v243, %v253
        %v267 = vmul.f32 %v244, %v253
        %v268 = vmul.f32 %v245, %v253
        %v269 = vmul.f32 %v246, %v253
        %v270 = vmul.f32 %v247, %v253
        %v271 = vld [vmem:[#allocation7] sm:$0x1]
        %v273 = vlaneseq
        %v274 = vshrl.u32 %v273, 7
        %v275 = vsub.s32 0, %v274
        %v276 = vrot.slane %v271, %v275
        %v278 = vadd.f32 %v255, %v276
        %v279 = vadd.f32 %v256, %v276
        %v280 = vadd.f32 %v257, %v276
        %v281 = vadd.f32 %v258, %v276
        %v282 = vadd.f32 %v259, %v276
        %v283 = vadd.f32 %v260, %v276
        %v284 = vadd.f32 %v261, %v276
        %v285 = vadd.f32 %v262, %v276
        %v286 = vadd.f32 %v263, %v276
        %v287 = vadd.f32 %v264, %v276
        %v288 = vadd.f32 %v265, %v276
        %v289 = vadd.f32 %v266, %v276
        %v290 = vadd.f32 %v267, %v276
        %v291 = vadd.f32 %v268, %v276
        %v292 = vadd.f32 %v269, %v276
        %v293 = vadd.f32 %v270, %v276
        %v294 = vmax.f32 %v278, 0.0
        %v295 = vmax.f32 %v279, 0.0
        %v296 = vmax.f32 %v280, 0.0
        %v297 = vmax.f32 %v281, 0.0
        %v298 = vmax.f32 %v282, 0.0
        %v299 = vmax.f32 %v283, 0.0
        %v300 = vmax.f32 %v284, 0.0
        %v301 = vmax.f32 %v285, 0.0
        %v302 = vmax.f32 %v286, 0.0
        %v303 = vmax.f32 %v287, 0.0
        %v304 = vmax.f32 %v288, 0.0
        %v305 = vmax.f32 %v289, 0.0
        %v306 = vmax.f32 %v290, 0.0
        %v307 = vmax.f32 %v291, 0.0
        %v308 = vmax.f32 %v292, 0.0
        %v309 = vmax.f32 %v293, 0.0
        %v310 = vpack.c.bf16 %v295, %v294
        %v311 = vpack.c.bf16 %v297, %v296
        %v312 = vpack.c.bf16 %v299, %v298
        %v313 = vpack.c.bf16 %v301, %v300
        %v314 = vpack.c.bf16 %v303, %v302
        %v315 = vpack.c.bf16 %v305, %v304
        %v316 = vpack.c.bf16 %v307, %v306
        %v317 = vpack.c.bf16 %v309, %v308
        %v326 = vunpack.c.l.b16 %v310
        %v327 = vunpack.c.h.b16 %v310
        %v328 = vunpack.c.l.b16 %v311
        %v329 = vunpack.c.h.b16 %v311
        %v330 = vunpack.c.l.b16 %v312
        %v331 = vunpack.c.h.b16 %v312
        %v332 = vunpack.c.l.b16 %v313
        %v333 = vunpack.c.h.b16 %v313
        %v334 = vunpack.c.l.b16 %v314
        %v335 = vunpack.c.h.b16 %v314
        %v336 = vunpack.c.l.b16 %v315
        %v337 = vunpack.c.h.b16 %v315
        %v338 = vunpack.c.l.b16 %v316
        %v339 = vunpack.c.h.b16 %v316
        %v340 = vunpack.c.l.b16 %v317
        %v341 = vunpack.c.h.b16 %v317
        %v342 = vpack.c.b16 %v326, %v326
        %v343 = vpack.c.b16 %v327, %v327
        %v344 = vpack.c.b16 %v328, %v328
        %v345 = vpack.c.b16 %v329, %v329
        %v346 = vpack.c.b16 %v330, %v330
        %v347 = vpack.c.b16 %v331, %v331
        %v348 = vpack.c.b16 %v332, %v332
        %v349 = vpack.c.b16 %v333, %v333
        %v350 = vpack.c.b16 %v334, %v334
        %v351 = vpack.c.b16 %v335, %v335
        %v352 = vpack.c.b16 %v336, %v336
        %v353 = vpack.c.b16 %v337, %v337
        %v354 = vpack.c.b16 %v338, %v338
        %v355 = vpack.c.b16 %v339, %v339
        %v356 = vpack.c.b16 %v340, %v340
        %v357 = vpack.c.b16 %v341, %v341
        %374 = vst [vmem:[%s213] sm:$0xf] %v342
        %375 = vst [vmem:[%s213 + $0x4] sm:$0xf] %v343
        %376 = vst [vmem:[%s213 + $0x8] sm:$0xf] %v344
        %377 = vst [vmem:[%s213 + $0xc] sm:$0xf] %v345
        %378 = vst [vmem:[%s213 + $0x10] sm:$0xf] %v346
        %379 = vst [vmem:[%s213 + $0x14] sm:$0xf] %v347
        %380 = vst [vmem:[%s213 + $0x18] sm:$0xf] %v348
        %381 = vst [vmem:[%s213 + $0x1c] sm:$0xf] %v349
        %382 = vst [vmem:[%s213 + $0x20] sm:$0xf] %v350
        %383 = vst [vmem:[%s213 + $0x24] sm:$0xf] %v351
        %384 = vst [vmem:[%s213 + $0x28] sm:$0xf] %v352
        %385 = vst [vmem:[%s213 + $0x2c] sm:$0xf] %v353
        %386 = vst [vmem:[%s213 + $0x30] sm:$0xf] %v354
        %387 = vst [vmem:[%s213 + $0x34] sm:$0xf] %v355
        %388 = vst [vmem:[%s213 + $0x38] sm:$0xf] %v356
        %389 = vst [vmem:[%s213 + $0x3c] sm:$0xf] %v357
        %s390 = sand.u32 %s97, 1
        %s391 = scalar_lea.sflag [#allocation4], %s390
        %s392 = sand.u32 %s97, 1
        %s393 = smul.addr %s392, 64
        %s394 = scalar_lea.vmem [#allocation8], %s393
        // Predicated region
        $region45: #{graph_conv_forward.7} parent=31 // pred_check
          %p395 = pneg %p107
        $region46: #{graph_conv_forward.7} parent=31 // pred_check_branch
          %397 = sbr.rel (%p395) target = $region48
        $region47: #{graph_conv_forward.7} parent=31 // pred_region
          %s398 = smul.u32 16, %s21
          %s400 = ssub.s32 1024, 1024
          %401 = vsyncadd %s391, %s400
          %s402 = smul.addr %s398, 64
          %s403 = scalar_lea.hbm %s3, %s402
          %s404 = sshll.u32 %s394, 4
          %s405 = int_to_ptr.vmem [resolvable:$true] %s404
          %410 = dma.vmem_to_hbm [thread:$0]  %s405, 1024, %s403, %s391, 64, 64, 4
        $region48: #{graph_conv_forward.7} parent=31 // pred_fallthru
          _
      $region32: #{graph_conv_forward.7} parent=5 // pred_fallthru
        _
      %p411 = scmp.le.s32.totalorder 2, %s16
      // Predicated region
      $region49: #{graph_conv_forward.7} parent=5 // pred_check
        %p412 = pneg %p411
      $region50: #{graph_conv_forward.7} parent=5 // pred_check_branch
        %414 = sbr.rel (%p412) target = $region52
      $region51: #{graph_conv_forward.7} parent=5 // pred_region
        %s415 = ssub.s32 %s16, 2
        // Predicated region
        $region53: #{graph_conv_forward.7} parent=51 // pred_check
          %p416 = pneg %p113
        $region54: #{graph_conv_forward.7} parent=51 // pred_check_branch
          %418 = sbr.rel (%p416) target = $region56
        $region55: #{graph_conv_forward.7} parent=51 // pred_region
          %s419 = sand.u32 %s98, 1
          %s420 = scalar_lea.sflag [#allocation4], %s419
          %s421 = sand.u32 %s98, 1
          %s422 = smul.addr %s421, 64
          %s423 = scalar_lea.vmem [#allocation8], %s422
          %424 = dma.done %s420, 1024
        $region56: #{graph_conv_forward.7} parent=51 // pred_fallthru
          _
      $region52: #{graph_conv_forward.7} parent=5 // pred_fallthru
        _
    $region6: #{graph_conv_forward.7} parent=1 // loop_footer
      %s20 = sadd.s32 1, %s16
    $region7: #{graph_conv_forward.7} parent=1 // loop_footer_branch
      %15 = sbr.rel target = $region3
    $region8: #{graph_conv_forward.7} parent=1 // loop_exit
      _
    %425 = vsyncpa [#allocation3], 1
    %s426 = scalar_lea.sflag [#allocation3], 1
    %427 = vsyncpa %s426, 1
    %428 = vsyncpa [#allocation6], 1
    %429 = vsyncpa [#allocation4], 1
    %s430 = scalar_lea.sflag [#allocation4], 1
    %431 = vsyncpa %s430, 1

// kernel: graph_conv_forward.9
$region0: #{graph_conv_forward.9}
  #allocation0 [shape = 'u32[]', space=smem, size = 0x4, offset = 0x4, fixed_abs, tag = 'smem constant byte address 0x4 - core index']
  #allocation1 [shape = 'u32[144,128]{1,0:T(1,128)}', space=vmem, size = 0x12000, scoped, tag = 'internal scratch']
  %s0 = inlined_call_operand.hbm [shape: bf16[256,128], index: 0, kind: input, shape index: {}]
  %s1 = inlined_call_operand.hbm [shape: f32[1,128], index: 1, kind: input, shape index: {}]
  %s2 = inlined_call_operand.hbm [shape: f32[1,128], index: 2, kind: input, shape index: {}]
  %s3 = inlined_call_operand.hbm [shape: bf16[256,128], index: 3, kind: input, shape index: {}, may-alias: {3,4}]
  %s4 = inlined_call_operand.hbm [shape: bf16[256,128], index: 4, kind: output, shape index: {}, may-alias: {3,4}]
  %s5 = sld [smem:[#allocation0]]
  $region65: #{graph_conv_forward.9} parent=0
    _
  %s7 = ssub.s32 1, %s5
  %s8 = scalar_select 0, %s7, %s5
  $region1: #{graph_conv_forward.9} parent=0
    #allocation2 [shape = 'u8[65536]{0}', space=vmem, size = 0x10000, scoped, tag = 'input window, operand 0']
    #allocation3 [shape = 's32[2]{0}', space=sflag, size = 0x8, scoped, tag = 'scoped memory for graph_conv_forward.9']
    #allocation4 [shape = 's32[2]{0}', space=sflag, size = 0x8, scoped, tag = 'scoped memory for graph_conv_forward.9']
    #allocation5 [shape = 'u8[512]{0}', space=vmem, size = 0x400, scoped, tag = 'input window, operand 1, single buffered']
    #allocation6 [shape = 's32[1]{0}', space=sflag, size = 0x4, scoped, tag = 'scoped memory for graph_conv_forward.9']
    #allocation7 [shape = 'u8[512]{0}', space=vmem, size = 0x400, scoped, tag = 'input window, operand 2, single buffered']
    #allocation8 [shape = 'u8[65536]{0}', space=vmem, size = 0x10000, scoped, tag = 'input window, operand 3']
    #allocation9 [shape = 's32[2]{0}', space=sflag, size = 0x8, scoped, tag = 'scoped memory for graph_conv_forward.9']
    #allocation10 [shape = 'u8[65536]{0}', space=vmem, size = 0x10000, scoped, tag = 'output window, operand 0']
    %9 = vsyncpa [#allocation3], 0
    %s10 = scalar_lea.sflag [#allocation3], 1
    %11 = vsyncpa %s10, 0
    %12 = vsyncpa [#allocation6], 0
    %13 = vsyncpa [#allocation9], 0
    %s14 = scalar_lea.sflag [#allocation9], 1
    %15 = vsyncpa %s14, 0
    %16 = vsyncpa [#allocation4], 0
    %s17 = scalar_lea.sflag [#allocation4], 1
    %18 = vsyncpa %s17, 0
    loop: start=0, step=1, limit=4
    $region2: #{graph_conv_forward.9} parent=1 // loop_pre_header
      _
    $region3: #{graph_conv_forward.9} parent=1 // loop_header
      %s20 = sphi 0, %s24
      %p21 = scmp.ge.s32.totalorder %s20, 4
      %s30 = sphi 0, %s32
      %s33 = sphi 0, %s30
      %s34 = sphi 0, %s33
      %s50 = sphi 0, %s34
      %s54 = sphi 0, %s54
      %s56 = sphi 0, %s54
      %s57 = sphi 0, %s56
      %s71 = sphi 0, %s57
      %s75 = sphi 0, %s75
      %s77 = sphi 0, %s75
      %s78 = sphi 0, %s77
      %s92 = sphi 0, %s78
      %s98 = sphi 0, %s100
      %s101 = sphi 0, %s98
      %s102 = sphi 0, %s101
      %s118 = sphi 0, %s102
      %s124 = sphi 0, %s126
      %s127 = sphi 0, %s124
      %s128 = sphi 0, %s127
      %s144 = sphi 0, %s128
    $region4: #{graph_conv_forward.9} parent=1 // loop_header_branch
      %23 = sbr.rel (%p21) target = $region8
    $region5: #{graph_conv_forward.9} parent=1 // loop_body
      %s25 = ssub.s32 %s20, 1
      %s26 = ssub.s32 %s20, 2
      %s27 = sadd.s32 %s20, 1
      %s28 = ssub.s32 %s20, %s27
      %p29 = scmp.eq.s32.totalorder %s28, 0
      %s31 = sadd.s32 %s30, 1
      %s32 = scalar_select %p29, %s30, %s31
      %p35 = pneg %p29
      %p36 = scmp.eq.s32.totalorder %s20, 1
      %p37 = por %p35, %p36
      %p38 = scmp.ne.s32.totalorder %s30, %s33
      %p39 = scmp.eq.s32.totalorder %s20, 0
      %p40 = por %p38, %p39
      %p41 = scmp.ne.s32.totalorder %s30, %s33
      %p42 = scmp.eq.s32.totalorder %s25, 1
      %p43 = por %p41, %p42
      %p44 = scmp.ne.s32.totalorder %s33, %s34
      %p45 = scmp.eq.s32.totalorder %s25, 0
      %p46 = por %p44, %p45
      %p47 = scmp.ne.s32.totalorder %s33, %s34
      %p48 = scmp.eq.s32.totalorder %s26, 1
      %p49 = por %p47, %p48
      %p51 = scmp.ne.s32.totalorder %s34, %s50
      %p52 = scmp.eq.s32.totalorder %s26, 0
      %p53 = por %p51, %p52
      %s55 = sadd.s32 %s54, 1
      %p58 = scmp.eq.s32.totalorder %s20, 1
      %p59 = scmp.ne.s32.totalorder %s54, %s56
      %p60 = scmp.eq.s32.totalorder %s20, 0
      %p61 = por %p59, %p60
      %p62 = scmp.ne.s32.totalorder %s54, %s56
      %p63 = scmp.eq.s32.totalorder %s25, 1
      %p64 = por %p62, %p63
      %p65 = scmp.ne.s32.totalorder %s56, %s57
      %p66 = scmp.eq.s32.totalorder %s25, 0
      %p67 = por %p65, %p66
      %p68 = scmp.ne.s32.totalorder %s56, %s57
      %p69 = scmp.eq.s32.totalorder %s26, 1
      %p70 = por %p68, %p69
      %p72 = scmp.ne.s32.totalorder %s57, %s71
      %p73 = scmp.eq.s32.totalorder %s26, 0
      %p74 = por %p72, %p73
      %s76 = sadd.s32 %s75, 1
      %p79 = scmp.eq.s32.totalorder %s20, 1
      %p80 = scmp.ne.s32.totalorder %s75, %s77
      %p81 = scmp.eq.s32.totalorder %s20, 0
      %p82 = por %p80, %p81
      %p83 = scmp.ne.s32.totalorder %s75, %s77
      %p84 = scmp.eq.s32.totalorder %s25, 1
      %p85 = por %p83, %p84
      %p86 = scmp.ne.s32.totalorder %s77, %s78
      %p87 = scmp.eq.s32.totalorder %s25, 0
      %p88 = por %p86, %p87
      %p89 = scmp.ne.s32.totalorder %s77, %s78
      %p90 = scmp.eq.s32.totalorder %s26, 1
      %p91 = por %p89, %p90
      %p93 = scmp.ne.s32.totalorder %s78, %s92
      %p94 = scmp.eq.s32.totalorder %s26, 0
      %p95 = por %p93, %p94
      %s96 = ssub.s32 %s20, %s27
      %p97 = scmp.eq.s32.totalorder %s96, 0
      %s99 = sadd.s32 %s98, 1
      %s100 = scalar_select %p97, %s98, %s99
      %p103 = pneg %p97
      %p104 = scmp.eq.s32.totalorder %s20, 1
      %p105 = por %p103, %p104
      %p106 = scmp.ne.s32.totalorder %s98, %s101
      %p107 = scmp.eq.s32.totalorder %s20, 0
      %p108 = por %p106, %p107
      %p109 = scmp.ne.s32.totalorder %s98, %s101
      %p110 = scmp.eq.s32.totalorder %s25, 1
      %p111 = por %p109, %p110
      %p112 = scmp.ne.s32.totalorder %s101, %s102
      %p113 = scmp.eq.s32.totalorder %s25, 0
      %p114 = por %p112, %p113
      %p115 = scmp.ne.s32.totalorder %s101, %s102
      %p116 = scmp.eq.s32.totalorder %s26, 1
      %p117 = por %p115, %p116
      %p119 = scmp.ne.s32.totalorder %s102, %s118
      %p120 = scmp.eq.s32.totalorder %s26, 0
      %p121 = por %p119, %p120
      %s122 = ssub.s32 %s20, %s27
      %p123 = scmp.eq.s32.totalorder %s122, 0
      %s125 = sadd.s32 %s124, 1
      %s126 = scalar_select %p123, %s124, %s125
      %p129 = pneg %p123
      %p130 = scmp.eq.s32.totalorder %s20, 1
      %p131 = por %p129, %p130
      %p132 = scmp.ne.s32.totalorder %s124, %s127
      %p133 = scmp.eq.s32.totalorder %s20, 0
      %p134 = por %p132, %p133
      %p135 = scmp.ne.s32.totalorder %s124, %s127
      %p136 = scmp.eq.s32.totalorder %s25, 1
      %p137 = por %p135, %p136
      %p138 = scmp.ne.s32.totalorder %s127, %s128
      %p139 = scmp.eq.s32.totalorder %s25, 0
      %p140 = por %p138, %p139
      %p141 = scmp.ne.s32.totalorder %s127, %s128
      %p142 = scmp.eq.s32.totalorder %s26, 1
      %p143 = por %p141, %p142
      %p145 = scmp.ne.s32.totalorder %s128, %s144
      %p146 = scmp.eq.s32.totalorder %s26, 0
      %p147 = por %p145, %p146
      %p148 = scmp.le.s32.totalorder 1, %s20
      %p149 = scmp.lt.s32.totalorder %s20, 3
      %p150 = pnand %p148, %p149
      %p151 = pneg %p150
      // Predicated region
      $region9: #{graph_conv_forward.9} parent=5 // pred_check
        _
      $region10: #{graph_conv_forward.9} parent=5 // pred_check_branch
        %153 = sbr.rel (%p150) target = $region12
      $region11: #{graph_conv_forward.9} parent=5 // pred_region
        %s154 = ssub.s32 %s20, 1
        // Predicated region
        $region13: #{graph_conv_forward.9} parent=11 // pred_check
          %p155 = pneg %p67
        $region14: #{graph_conv_forward.9} parent=11 // pred_check_branch
          %157 = sbr.rel (%p155) target = $region16
        $region15: #{graph_conv_forward.9} parent=11 // pred_region
          %s159 = ssub.s32 16, 16
          %160 = vsyncadd [#allocation6], %s159
          %s162 = sshll.u32 [#allocation5], 4
          %s163 = int_to_ptr.vmem [resolvable:$true] %s162
          %165 = dma.hbm_to_vmem [thread:$0]  %s1, 16, %s163, [#allocation6]
        $region16: #{graph_conv_forward.9} parent=11 // pred_fallthru
          _
        // Predicated region
        $region17: #{graph_conv_forward.9} parent=11 // pred_check
          %p166 = pneg %p88
        $region18: #{graph_conv_forward.9} parent=11 // pred_check_branch
          %168 = sbr.rel (%p166) target = $region20
        $region19: #{graph_conv_forward.9} parent=11 // pred_region
          %s170 = ssub.s32 16, 16
          %171 = vsyncadd [#allocation6], %s170
          %s173 = sshll.u32 [#allocation7], 4
          %s174 = int_to_ptr.vmem [resolvable:$true] %s173
          %176 = dma.hbm_to_vmem [thread:$0]  %s2, 16, %s174, [#allocation6]
        $region20: #{graph_conv_forward.9} parent=11 // pred_fallthru
          _
      $region12: #{graph_conv_forward.9} parent=5 // pred_fallthru
        _
      %p177 = scmp.lt.s32.totalorder %s20, 2
      // Predicated region
      $region21: #{graph_conv_forward.9} parent=5 // pred_check
        %p178 = pneg %p177
      $region22: #{graph_conv_forward.9} parent=5 // pred_check_branch
        %180 = sbr.rel (%p178) target = $region24
      $region23: #{graph_conv_forward.9} parent=5 // pred_region
        // Predicated region
        $region25: #{graph_conv_forward.9} parent=23 // pred_check
          %p181 = pneg %p40
        $region26: #{graph_conv_forward.9} parent=23 // pred_check_branch
          %183 = sbr.rel (%p181) target = $region28
        $region27: #{graph_conv_forward.9} parent=23 // pred_region
          %s184 = sand.u32 %s30, 1
          %s185 = scalar_lea.sflag [#allocation3], %s184
          %s186 = sand.u32 %s30, 1
          %s187 = smul.addr %s186, 64
          %s188 = scalar_lea.vmem [#allocation2], %s187
          %s189 = smul.u32 16, %s20
          %s191 = ssub.s32 1024, 1024
          %192 = vsyncadd %s185, %s191
          %s193 = smul.addr %s189, 64
          %s194 = scalar_lea.hbm %s0, %s193
          %s195 = sshll.u32 %s188, 4
          %s196 = int_to_ptr.vmem [resolvable:$true] %s195
          %201 = dma.hbm_to_vmem [thread:$0]  %s194, 1024, %s196, %s185, 64, 64, 4
        $region28: #{graph_conv_forward.9} parent=23 // pred_fallthru
          _
        // Predicated region
        $region29: #{graph_conv_forward.9} parent=23 // pred_check
          %p202 = pneg %p108
        $region30: #{graph_conv_forward.9} parent=23 // pred_check_branch
          %204 = sbr.rel (%p202) target = $region32
        $region31: #{graph_conv_forward.9} parent=23 // pred_region
          %s205 = sand.u32 %s98, 1
          %s206 = scalar_lea.sflag [#allocation9], %s205
          %s207 = sand.u32 %s98, 1
          %s208 = smul.addr %s207, 64
          %s209 = scalar_lea.vmem [#allocation8], %s208
          %s210 = smul.u32 16, %s20
          %s212 = ssub.s32 1024, 1024
          %213 = vsyncadd %s206, %s212
          %s214 = smul.addr %s210, 64
          %s215 = scalar_lea.hbm %s3, %s214
          %s216 = sshll.u32 %s209, 4
          %s217 = int_to_ptr.vmem [resolvable:$true] %s216
          %222 = dma.hbm_to_vmem [thread:$0]  %s215, 1024, %s217, %s206, 64, 64, 4
        $region32: #{graph_conv_forward.9} parent=23 // pred_fallthru
          _
      $region24: #{graph_conv_forward.9} parent=5 // pred_fallthru
        _
      %p223 = scmp.le.s32.totalorder 1, %s20
      %p224 = scmp.lt.s32.totalorder %s20, 3
      %p225 = pnand %p223, %p224
      %p226 = pneg %p225
      // Predicated region
      $region33: #{graph_conv_forward.9} parent=5 // pred_check
        _
      $region34: #{graph_conv_forward.9} parent=5 // pred_check_branch
        %228 = sbr.rel (%p225) target = $region36
      $region35: #{graph_conv_forward.9} parent=5 // pred_region
        %s229 = ssub.s32 %s20, 1
        %s230 = sand.u32 %s33, 1
        %s231 = scalar_lea.sflag [#allocation3], %s230
        %s232 = sand.u32 %s33, 1
        %s233 = smul.addr %s232, 64
        %s234 = scalar_lea.vmem [#allocation2], %s233
        // Predicated region
        $region37: #{graph_conv_forward.9} parent=35 // pred_check
          %p235 = pneg %p46
        $region38: #{graph_conv_forward.9} parent=35 // pred_check_branch
          %237 = sbr.rel (%p235) target = $region40
        $region39: #{graph_conv_forward.9} parent=35 // pred_region
          %238 = dma.done %s231, 1024
        $region40: #{graph_conv_forward.9} parent=35 // pred_fallthru
          _
        // Predicated region
        $region41: #{graph_conv_forward.9} parent=35 // pred_check
          %p239 = pneg %p67
        $region42: #{graph_conv_forward.9} parent=35 // pred_check_branch
          %241 = sbr.rel (%p239) target = $region44
        $region43: #{graph_conv_forward.9} parent=35 // pred_region
          %242 = dma.done [#allocation6], 16
        $region44: #{graph_conv_forward.9} parent=35 // pred_fallthru
          _
        // Predicated region
        $region45: #{graph_conv_forward.9} parent=35 // pred_check
          %p243 = pneg %p88
        $region46: #{graph_conv_forward.9} parent=35 // pred_check_branch
          %245 = sbr.rel (%p243) target = $region48
        $region47: #{graph_conv_forward.9} parent=35 // pred_region
          %246 = dma.done [#allocation6], 16
        $region48: #{graph_conv_forward.9} parent=35 // pred_fallthru
          _
        %s247 = sand.u32 %s101, 1
        %s248 = scalar_lea.sflag [#allocation9], %s247
        %s249 = sand.u32 %s101, 1
        %s250 = smul.addr %s249, 64
        %s251 = scalar_lea.vmem [#allocation8], %s250
        // Predicated region
        $region49: #{graph_conv_forward.9} parent=35 // pred_check
          %p252 = pneg %p114
        $region50: #{graph_conv_forward.9} parent=35 // pred_check_branch
          %254 = sbr.rel (%p252) target = $region52
        $region51: #{graph_conv_forward.9} parent=35 // pred_region
          %255 = dma.done %s248, 1024
        $region52: #{graph_conv_forward.9} parent=35 // pred_fallthru
          _
        %s256 = sand.u32 %s33, 1
        %s257 = scalar_lea.sflag [#allocation3], %s256
        %s258 = sand.u32 %s33, 1
        %s259 = smul.addr %s258, 64
        %s260 = scalar_lea.vmem [#allocation2], %s259
        %p261 = pneg %p46
        %p262 = pneg %p43
        %p263 = pneg %p67
        %p264 = pneg %p64
        %p265 = pneg %p88
        %p266 = pneg %p85
        %s267 = sand.u32 %s101, 1
        %s268 = scalar_lea.sflag [#allocation9], %s267
        %s269 = sand.u32 %s101, 1
        %s270 = smul.addr %s269, 64
        %s271 = scalar_lea.vmem [#allocation8], %s270
        %p272 = pneg %p114
        %p273 = pneg %p111
        %p274 = pneg %p140
        %p275 = pneg %p137
        %s276 = sand.u32 %s127, 1
        %s277 = scalar_lea.sflag [#allocation4], %s276
        %s278 = sand.u32 %s127, 1
        %s279 = smul.addr %s278, 64
        %s280 = scalar_lea.vmem [#allocation10], %s279
        %s281 = smul.u32 16, %s25
        %s282 = smul.u32 16, %s25
        %s283 = smul.u32 16, %s25
        %v284 = vld [vmem:[%s234] sm:$0xf]
        %v285 = vld [vmem:[%s234 + $0x4] sm:$0xf]
        %v286 = vld [vmem:[%s234 + $0x8] sm:$0xf]
        %v287 = vld [vmem:[%s234 + $0xc] sm:$0xf]
        %v288 = vld [vmem:[%s234 + $0x10] sm:$0xf]
        %v289 = vld [vmem:[%s234 + $0x14] sm:$0xf]
        %v290 = vld [vmem:[%s234 + $0x18] sm:$0xf]
        %v291 = vld [vmem:[%s234 + $0x1c] sm:$0xf]
        %v292 = vld [vmem:[%s234 + $0x20] sm:$0xf]
        %v293 = vld [vmem:[%s234 + $0x24] sm:$0xf]
        %v294 = vld [vmem:[%s234 + $0x28] sm:$0xf]
        %v295 = vld [vmem:[%s234 + $0x2c] sm:$0xf]
        %v296 = vld [vmem:[%s234 + $0x30] sm:$0xf]
        %v297 = vld [vmem:[%s234 + $0x34] sm:$0xf]
        %v298 = vld [vmem:[%s234 + $0x38] sm:$0xf]
        %v299 = vld [vmem:[%s234 + $0x3c] sm:$0xf]
        %v300 = vunpack.c.l.bf16 %v284
        %v301 = vunpack.c.l.bf16 %v285
        %v302 = vunpack.c.l.bf16 %v286
        %v303 = vunpack.c.l.bf16 %v287
        %v304 = vunpack.c.l.bf16 %v288
        %v305 = vunpack.c.l.bf16 %v289
        %v306 = vunpack.c.l.bf16 %v290
        %v307 = vunpack.c.l.bf16 %v291
        %v308 = vunpack.c.l.bf16 %v292
        %v309 = vunpack.c.l.bf16 %v293
        %v310 = vunpack.c.l.bf16 %v294
        %v311 = vunpack.c.l.bf16 %v295
        %v312 = vunpack.c.l.bf16 %v296
        %v313 = vunpack.c.l.bf16 %v297
        %v314 = vunpack.c.l.bf16 %v298
        %v315 = vunpack.c.l.bf16 %v299
        %v316 = vld [vmem:[#allocation5] sm:$0x1]
        %v318 = vlaneseq
        %v319 = vshrl.u32 %v318, 7
        %v320 = vsub.s32 0, %v319
        %v321 = vrot.slane %v316, %v320
        %v323 = vmul.f32 %v300, %v321
        %v324 = vmul.f32 %v301, %v321
        %v325 = vmul.f32 %v302, %v321
        %v326 = vmul.f32 %v303, %v321
        %v327 = vmul.f32 %v304, %v321
        %v328 = vmul.f32 %v305, %v321
        %v329 = vmul.f32 %v306, %v321
        %v330 = vmul.f32 %v307, %v321
        %v331 = vmul.f32 %v308, %v321
        %v332 = vmul.f32 %v309, %v321
        %v333 = vmul.f32 %v310, %v321
        %v334 = vmul.f32 %v311, %v321
        %v335 = vmul.f32 %v312, %v321
        %v336 = vmul.f32 %v313, %v321
        %v337 = vmul.f32 %v314, %v321
        %v338 = vmul.f32 %v315, %v321
        %v339 = vld [vmem:[#allocation7] sm:$0x1]
        %v341 = vlaneseq
        %v342 = vshrl.u32 %v341, 7
        %v343 = vsub.s32 0, %v342
        %v344 = vrot.slane %v339, %v343
        %v346 = vadd.f32 %v323, %v344
        %v347 = vadd.f32 %v324, %v344
        %v348 = vadd.f32 %v325, %v344
        %v349 = vadd.f32 %v326, %v344
        %v350 = vadd.f32 %v327, %v344
        %v351 = vadd.f32 %v328, %v344
        %v352 = vadd.f32 %v329, %v344
        %v353 = vadd.f32 %v330, %v344
        %v354 = vadd.f32 %v331, %v344
        %v355 = vadd.f32 %v332, %v344
        %v356 = vadd.f32 %v333, %v344
        %v357 = vadd.f32 %v334, %v344
        %v358 = vadd.f32 %v335, %v344
        %v359 = vadd.f32 %v336, %v344
        %v360 = vadd.f32 %v337, %v344
        %v361 = vadd.f32 %v338, %v344
        %v362 = vmax.f32 %v346, 0.0
        %v363 = vmax.f32 %v347, 0.0
        %v364 = vmax.f32 %v348, 0.0
        %v365 = vmax.f32 %v349, 0.0
        %v366 = vmax.f32 %v350, 0.0
        %v367 = vmax.f32 %v351, 0.0
        %v368 = vmax.f32 %v352, 0.0
        %v369 = vmax.f32 %v353, 0.0
        %v370 = vmax.f32 %v354, 0.0
        %v371 = vmax.f32 %v355, 0.0
        %v372 = vmax.f32 %v356, 0.0
        %v373 = vmax.f32 %v357, 0.0
        %v374 = vmax.f32 %v358, 0.0
        %v375 = vmax.f32 %v359, 0.0
        %v376 = vmax.f32 %v360, 0.0
        %v377 = vmax.f32 %v361, 0.0
        %v378 = vld [vmem:[%s251] sm:$0xf]
        %v379 = vld [vmem:[%s251 + $0x4] sm:$0xf]
        %v380 = vld [vmem:[%s251 + $0x8] sm:$0xf]
        %v381 = vld [vmem:[%s251 + $0xc] sm:$0xf]
        %v382 = vld [vmem:[%s251 + $0x10] sm:$0xf]
        %v383 = vld [vmem:[%s251 + $0x14] sm:$0xf]
        %v384 = vld [vmem:[%s251 + $0x18] sm:$0xf]
        %v385 = vld [vmem:[%s251 + $0x1c] sm:$0xf]
        %v386 = vld [vmem:[%s251 + $0x20] sm:$0xf]
        %v387 = vld [vmem:[%s251 + $0x24] sm:$0xf]
        %v388 = vld [vmem:[%s251 + $0x28] sm:$0xf]
        %v389 = vld [vmem:[%s251 + $0x2c] sm:$0xf]
        %v390 = vld [vmem:[%s251 + $0x30] sm:$0xf]
        %v391 = vld [vmem:[%s251 + $0x34] sm:$0xf]
        %v392 = vld [vmem:[%s251 + $0x38] sm:$0xf]
        %v393 = vld [vmem:[%s251 + $0x3c] sm:$0xf]
        %v394 = vunpack.c.l.bf16 %v378
        %v395 = vunpack.c.l.bf16 %v379
        %v396 = vunpack.c.l.bf16 %v380
        %v397 = vunpack.c.l.bf16 %v381
        %v398 = vunpack.c.l.bf16 %v382
        %v399 = vunpack.c.l.bf16 %v383
        %v400 = vunpack.c.l.bf16 %v384
        %v401 = vunpack.c.l.bf16 %v385
        %v402 = vunpack.c.l.bf16 %v386
        %v403 = vunpack.c.l.bf16 %v387
        %v404 = vunpack.c.l.bf16 %v388
        %v405 = vunpack.c.l.bf16 %v389
        %v406 = vunpack.c.l.bf16 %v390
        %v407 = vunpack.c.l.bf16 %v391
        %v408 = vunpack.c.l.bf16 %v392
        %v409 = vunpack.c.l.bf16 %v393
        %v410 = vadd.f32 %v362, %v394
        %v411 = vadd.f32 %v363, %v395
        %v412 = vadd.f32 %v364, %v396
        %v413 = vadd.f32 %v365, %v397
        %v414 = vadd.f32 %v366, %v398
        %v415 = vadd.f32 %v367, %v399
        %v416 = vadd.f32 %v368, %v400
        %v417 = vadd.f32 %v369, %v401
        %v418 = vadd.f32 %v370, %v402
        %v419 = vadd.f32 %v371, %v403
        %v420 = vadd.f32 %v372, %v404
        %v421 = vadd.f32 %v373, %v405
        %v422 = vadd.f32 %v374, %v406
        %v423 = vadd.f32 %v375, %v407
        %v424 = vadd.f32 %v376, %v408
        %v425 = vadd.f32 %v377, %v409
        %v426 = vpack.c.bf16 %v411, %v410
        %v427 = vpack.c.bf16 %v413, %v412
        %v428 = vpack.c.bf16 %v415, %v414
        %v429 = vpack.c.bf16 %v417, %v416
        %v430 = vpack.c.bf16 %v419, %v418
        %v431 = vpack.c.bf16 %v421, %v420
        %v432 = vpack.c.bf16 %v423, %v422
        %v433 = vpack.c.bf16 %v425, %v424
        %v442 = vunpack.c.l.b16 %v426
        %v443 = vunpack.c.h.b16 %v426
        %v444 = vunpack.c.l.b16 %v427
        %v445 = vunpack.c.h.b16 %v427
        %v446 = vunpack.c.l.b16 %v428
        %v447 = vunpack.c.h.b16 %v428
        %v448 = vunpack.c.l.b16 %v429
        %v449 = vunpack.c.h.b16 %v429
        %v450 = vunpack.c.l.b16 %v430
        %v451 = vunpack.c.h.b16 %v430
        %v452 = vunpack.c.l.b16 %v431
        %v453 = vunpack.c.h.b16 %v431
        %v454 = vunpack.c.l.b16 %v432
        %v455 = vunpack.c.h.b16 %v432
        %v456 = vunpack.c.l.b16 %v433
        %v457 = vunpack.c.h.b16 %v433
        %v458 = vpack.c.b16 %v442, %v442
        %v459 = vpack.c.b16 %v443, %v443
        %v460 = vpack.c.b16 %v444, %v444
        %v461 = vpack.c.b16 %v445, %v445
        %v462 = vpack.c.b16 %v446, %v446
        %v463 = vpack.c.b16 %v447, %v447
        %v464 = vpack.c.b16 %v448, %v448
        %v465 = vpack.c.b16 %v449, %v449
        %v466 = vpack.c.b16 %v450, %v450
        %v467 = vpack.c.b16 %v451, %v451
        %v468 = vpack.c.b16 %v452, %v452
        %v469 = vpack.c.b16 %v453, %v453
        %v470 = vpack.c.b16 %v454, %v454
        %v471 = vpack.c.b16 %v455, %v455
        %v472 = vpack.c.b16 %v456, %v456
        %v473 = vpack.c.b16 %v457, %v457
        %490 = vst [vmem:[%s280] sm:$0xf] %v458
        %491 = vst [vmem:[%s280 + $0x4] sm:$0xf] %v459
        %492 = vst [vmem:[%s280 + $0x8] sm:$0xf] %v460
        %493 = vst [vmem:[%s280 + $0xc] sm:$0xf] %v461
        %494 = vst [vmem:[%s280 + $0x10] sm:$0xf] %v462
        %495 = vst [vmem:[%s280 + $0x14] sm:$0xf] %v463
        %496 = vst [vmem:[%s280 + $0x18] sm:$0xf] %v464
        %497 = vst [vmem:[%s280 + $0x1c] sm:$0xf] %v465
        %498 = vst [vmem:[%s280 + $0x20] sm:$0xf] %v466
        %499 = vst [vmem:[%s280 + $0x24] sm:$0xf] %v467
        %500 = vst [vmem:[%s280 + $0x28] sm:$0xf] %v468
        %501 = vst [vmem:[%s280 + $0x2c] sm:$0xf] %v469
        %502 = vst [vmem:[%s280 + $0x30] sm:$0xf] %v470
        %503 = vst [vmem:[%s280 + $0x34] sm:$0xf] %v471
        %504 = vst [vmem:[%s280 + $0x38] sm:$0xf] %v472
        %505 = vst [vmem:[%s280 + $0x3c] sm:$0xf] %v473
        %s506 = sand.u32 %s127, 1
        %s507 = scalar_lea.sflag [#allocation4], %s506
        %s508 = sand.u32 %s127, 1
        %s509 = smul.addr %s508, 64
        %s510 = scalar_lea.vmem [#allocation10], %s509
        // Predicated region
        $region53: #{graph_conv_forward.9} parent=35 // pred_check
          %p511 = pneg %p137
        $region54: #{graph_conv_forward.9} parent=35 // pred_check_branch
          %513 = sbr.rel (%p511) target = $region56
        $region55: #{graph_conv_forward.9} parent=35 // pred_region
          %s514 = smul.u32 16, %s25
          %s516 = ssub.s32 1024, 1024
          %517 = vsyncadd %s507, %s516
          %s518 = smul.addr %s514, 64
          %s519 = scalar_lea.hbm %s4, %s518
          %s520 = sshll.u32 %s510, 4
          %s521 = int_to_ptr.vmem [resolvable:$true] %s520
          %526 = dma.vmem_to_hbm [thread:$0]  %s521, 1024, %s519, %s507, 64, 64, 4
        $region56: #{graph_conv_forward.9} parent=35 // pred_fallthru
          _
      $region36: #{graph_conv_forward.9} parent=5 // pred_fallthru
        _
      %p527 = scmp.le.s32.totalorder 2, %s20
      // Predicated region
      $region57: #{graph_conv_forward.9} parent=5 // pred_check
        %p528 = pneg %p527
      $region58: #{graph_conv_forward.9} parent=5 // pred_check_branch
        %530 = sbr.rel (%p528) target = $region60
      $region59: #{graph_conv_forward.9} parent=5 // pred_region
        %s531 = ssub.s32 %s20, 2
        // Predicated region
        $region61: #{graph_conv_forward.9} parent=59 // pred_check
          %p532 = pneg %p143
        $region62: #{graph_conv_forward.9} parent=59 // pred_check_branch
          %534 = sbr.rel (%p532) target = $region64
        $region63: #{graph_conv_forward.9} parent=59 // pred_region
          %s535 = sand.u32 %s128, 1
          %s536 = scalar_lea.sflag [#allocation4], %s535
          %s537 = sand.u32 %s128, 1
          %s538 = smul.addr %s537, 64
          %s539 = scalar_lea.vmem [#allocation10], %s538
          %540 = dma.done %s536, 1024
        $region64: #{graph_conv_forward.9} parent=59 // pred_fallthru
          _
      $region60: #{graph_conv_forward.9} parent=5 // pred_fallthru
        _
    $region6: #{graph_conv_forward.9} parent=1 // loop_footer
      %s24 = sadd.s32 1, %s20
    $region7: #{graph_conv_forward.9} parent=1 // loop_footer_branch
      %19 = sbr.rel target = $region3
    $region8: #{graph_conv_forward.9} parent=1 // loop_exit
      _
    %541 = vsyncpa [#allocation3], 1
    %s542 = scalar_lea.sflag [#allocation3], 1
    %543 = vsyncpa %s542, 1
    %544 = vsyncpa [#allocation6], 1
    %545 = vsyncpa [#allocation9], 1
    %s546 = scalar_lea.sflag [#allocation9], 1
    %547 = vsyncpa %s546, 1
    %548 = vsyncpa [#allocation4], 1
    %s549 = scalar_lea.sflag [#allocation4], 1
    %550 = vsyncpa %s549, 1

// kernel: graph_conv_forward.8
$region0: #{graph_conv_forward.8}
  #allocation0 [shape = 'u32[]', space=smem, size = 0x4, offset = 0x4, fixed_abs, tag = 'smem constant byte address 0x4 - core index']
  #allocation1 [shape = 'u32[144,128]{1,0:T(1,128)}', space=vmem, size = 0x12000, scoped, tag = 'internal scratch']
  #allocation2 [shape = 'f32[128,128]{1,0:T(8,128)}', space=vmem, size = 0x10000, scoped, tag = 'scratch operand']
  %s0 = inlined_call_operand.hbm [shape: bf16[256,256], index: 0, kind: input, shape index: {}]
  %s1 = inlined_call_operand.hbm [shape: bf16[256,128], index: 1, kind: input, shape index: {}]
  %s2 = inlined_call_operand.hbm [shape: bf16[128,128], index: 2, kind: input, shape index: {}]
  %s3 = inlined_call_operand.hbm [shape: bf16[256,128], index: 3, kind: output, shape index: {0}]
  %s4 = inlined_call_operand.hbm [shape: f32[2,1,128], index: 4, kind: output, shape index: {1}]
  %s5 = inlined_call_operand.hbm [shape: f32[2,1,128], index: 5, kind: output, shape index: {2}]
  %6 = xla_tuple %s3, %s4, %s5
  %s7 = sld [smem:[#allocation0]]
  $region81: #{graph_conv_forward.8} parent=0
    _
  %s9 = ssub.s32 1, %s7
  %s10 = scalar_select 0, %s9, %s7
  $region1: #{graph_conv_forward.8} parent=0
    #allocation3 [shape = 'u8[65536]{0}', space=vmem, size = 0x10000, scoped, tag = 'input window, operand 0']
    #allocation4 [shape = 's32[2]{0}', space=sflag, size = 0x8, scoped, tag = 'scoped memory for graph_conv_forward.8']
    #allocation5 [shape = 's32[2]{0}', space=sflag, size = 0x8, scoped, tag = 'scoped memory for graph_conv_forward.8']
    #allocation6 [shape = 'u8[65536]{0}', space=vmem, size = 0x10000, scoped, tag = 'input window, operand 1']
    #allocation7 [shape = 's32[2]{0}', space=sflag, size = 0x8, scoped, tag = 'scoped memory for graph_conv_forward.8']
    #allocation8 [shape = 'u8[32768]{0}', space=vmem, size = 0x8000, scoped, tag = 'input window, operand 2, single buffered']
    #allocation9 [shape = 'u8[65536]{0}', space=vmem, size = 0x10000, scoped, tag = 'output window, operand 0']
    #allocation10 [shape = 'u8[1024]{0}', space=vmem, size = 0x400, scoped, tag = 'output window, operand 1']
    #allocation11 [shape = 's32[2]{0}', space=sflag, size = 0x8, scoped, tag = 'scoped memory for graph_conv_forward.8']
    #allocation12 [shape = 'u8[1024]{0}', space=vmem, size = 0x400, scoped, tag = 'output window, operand 2']
    %11 = vsyncpa [#allocation4], 0
    %s12 = scalar_lea.sflag [#allocation4], 1
    %13 = vsyncpa %s12, 0
    %14 = vsyncpa [#allocation7], 0
    %s15 = scalar_lea.sflag [#allocation7], 1
    %16 = vsyncpa %s15, 0
    %17 = vsyncpa [#allocation5], 0
    %s18 = scalar_lea.sflag [#allocation5], 1
    %19 = vsyncpa %s18, 0
    %20 = vsyncpa [#allocation11], 0
    %s21 = scalar_lea.sflag [#allocation11], 1
    %22 = vsyncpa %s21, 0
    loop: start=0, step=1, limit=6
    $region2: #{graph_conv_forward.8} parent=1 // loop_pre_header
      _
    $region3: #{graph_conv_forward.8} parent=1 // loop_header
      %s24 = sphi 0, %s28
      %p25 = scmp.ge.s32.totalorder %s24, 6
      %s31 = sphi 0, %s43
      %s32 = sphi 0, %s39
      %s33 = sphi 0, %s31
      %s34 = sphi 0, %s32
      %s35 = sphi 0, %s33
      %s36 = sphi 0, %s34
      %s48 = sphi 0, %s50
      %s51 = sphi 0, %s48
      %s52 = sphi 0, %s51
      %s68 = sphi 0, %s52
      %s74 = sphi 0, %s76
      %s77 = sphi 0, %s74
      %s78 = sphi 0, %s77
      %s94 = sphi 0, %s78
      %s98 = sphi 0, %s98
      %s100 = sphi 0, %s98
      %s101 = sphi 0, %s100
      %s115 = sphi 0, %s101
      %s121 = sphi 0, %s123
      %s124 = sphi 0, %s121
      %s125 = sphi 0, %s124
      %s141 = sphi 0, %s125
      %s147 = sphi 0, %s149
      %s150 = sphi 0, %s147
      %s151 = sphi 0, %s150
      %s167 = sphi 0, %s151
      %s173 = sphi 0, %s175
      %s176 = sphi 0, %s173
      %s177 = sphi 0, %s176
      %s193 = sphi 0, %s177
    $region4: #{graph_conv_forward.8} parent=1 // loop_header_branch
      %27 = sbr.rel (%p25) target = $region8
    $region5: #{graph_conv_forward.8} parent=1 // loop_body
      %s29 = ssub.s32 %s24, 1
      %s30 = ssub.s32 %s24, 2
      %s37 = sadd.s32 1, %s32
      %p38 = scmp.ge.s32.totalorder %s37, 2
      %s39 = scalar_select %p38, 0, %s37
      %s40 = sadd.s32 1, %s31
      %s41 = scalar_select %p38, %s40, %s31
      %p42 = scmp.ge.s32.totalorder %s41, 2
      %s43 = scalar_select %p42, 0, %s41
      %s44 = ssub.s32 %s31, %s43
      %s45 = ssub.s32 %s32, %s39
      %s46 = sor.u32 %s44, %s45
      %p47 = scmp.eq.s32.totalorder %s46, 0
      %s49 = sadd.s32 %s48, 1
      %s50 = scalar_select %p47, %s48, %s49
      %p53 = pneg %p47
      %p54 = scmp.eq.s32.totalorder %s24, 3
      %p55 = por %p53, %p54
      %p56 = scmp.ne.s32.totalorder %s48, %s51
      %p57 = scmp.eq.s32.totalorder %s24, 0
      %p58 = por %p56, %p57
      %p59 = scmp.ne.s32.totalorder %s48, %s51
      %p60 = scmp.eq.s32.totalorder %s29, 3
      %p61 = por %p59, %p60
      %p62 = scmp.ne.s32.totalorder %s51, %s52
      %p63 = scmp.eq.s32.totalorder %s29, 0
      %p64 = por %p62, %p63
      %p65 = scmp.ne.s32.totalorder %s51, %s52
      %p66 = scmp.eq.s32.totalorder %s30, 3
      %p67 = por %p65, %p66
      %p69 = scmp.ne.s32.totalorder %s52, %s68
      %p70 = scmp.eq.s32.totalorder %s30, 0
      %p71 = por %p69, %p70
      %s72 = ssub.s32 %s32, %s39
      %p73 = scmp.eq.s32.totalorder %s72, 0
      %s75 = sadd.s32 %s74, 1
      %s76 = scalar_select %p73, %s74, %s75
      %p79 = pneg %p73
      %p80 = scmp.eq.s32.totalorder %s24, 3
      %p81 = por %p79, %p80
      %p82 = scmp.ne.s32.totalorder %s74, %s77
      %p83 = scmp.eq.s32.totalorder %s24, 0
      %p84 = por %p82, %p83
      %p85 = scmp.ne.s32.totalorder %s74, %s77
      %p86 = scmp.eq.s32.totalorder %s29, 3
      %p87 = por %p85, %p86
      %p88 = scmp.ne.s32.totalorder %s77, %s78
      %p89 = scmp.eq.s32.totalorder %s29, 0
      %p90 = por %p88, %p89
      %p91 = scmp.ne.s32.totalorder %s77, %s78
      %p92 = scmp.eq.s32.totalorder %s30, 3
      %p93 = por %p91, %p92
      %p95 = scmp.ne.s32.totalorder %s78, %s94
      %p96 = scmp.eq.s32.totalorder %s30, 0
      %p97 = por %p95, %p96
      %s99 = sadd.s32 %s98, 1
      %p102 = scmp.eq.s32.totalorder %s24, 3
      %p103 = scmp.ne.s32.totalorder %s98, %s100
      %p104 = scmp.eq.s32.totalorder %s24, 0
      %p105 = por %p103, %p104
      %p106 = scmp.ne.s32.totalorder %s98, %s100
      %p107 = scmp.eq.s32.totalorder %s29, 3
      %p108 = por %p106, %p107
      %p109 = scmp.ne.s32.totalorder %s100, %s101
      %p110 = scmp.eq.s32.totalorder %s29, 0
      %p111 = por %p109, %p110
      %p112 = scmp.ne.s32.totalorder %s100, %s101
      %p113 = scmp.eq.s32.totalorder %s30, 3
      %p114 = por %p112, %p113
      %p116 = scmp.ne.s32.totalorder %s101, %s115
      %p117 = scmp.eq.s32.totalorder %s30, 0
      %p118 = por %p116, %p117
      %s119 = ssub.s32 %s31, %s43
      %p120 = scmp.eq.s32.totalorder %s119, 0
      %s122 = sadd.s32 %s121, 1
      %s123 = scalar_select %p120, %s121, %s122
      %p126 = pneg %p120
      %p127 = scmp.eq.s32.totalorder %s24, 3
      %p128 = por %p126, %p127
      %p129 = scmp.ne.s32.totalorder %s121, %s124
      %p130 = scmp.eq.s32.totalorder %s24, 0
      %p131 = por %p129, %p130
      %p132 = scmp.ne.s32.totalorder %s121, %s124
      %p133 = scmp.eq.s32.totalorder %s29, 3
      %p134 = por %p132, %p133
      %p135 = scmp.ne.s32.totalorder %s124, %s125
      %p136 = scmp.eq.s32.totalorder %s29, 0
      %p137 = por %p135, %p136
      %p138 = scmp.ne.s32.totalorder %s124, %s125
      %p139 = scmp.eq.s32.totalorder %s30, 3
      %p140 = por %p138, %p139
      %p142 = scmp.ne.s32.totalorder %s125, %s141
      %p143 = scmp.eq.s32.totalorder %s30, 0
      %p144 = por %p142, %p143
      %s145 = ssub.s32 %s31, %s43
      %p146 = scmp.eq.s32.totalorder %s145, 0
      %s148 = sadd.s32 %s147, 1
      %s149 = scalar_select %p146, %s147, %s148
      %p152 = pneg %p146
      %p153 = scmp.eq.s32.totalorder %s24, 3
      %p154 = por %p152, %p153
      %p155 = scmp.ne.s32.totalorder %s147, %s150
      %p156 = scmp.eq.s32.totalorder %s24, 0
      %p157 = por %p155, %p156
      %p158 = scmp.ne.s32.totalorder %s147, %s150
      %p159 = scmp.eq.s32.totalorder %s29, 3
      %p160 = por %p158, %p159
      %p161 = scmp.ne.s32.totalorder %s150, %s151
      %p162 = scmp.eq.s32.totalorder %s29, 0
      %p163 = por %p161, %p162
      %p164 = scmp.ne.s32.totalorder %s150, %s151
      %p165 = scmp.eq.s32.totalorder %s30, 3
      %p166 = por %p164, %p165
      %p168 = scmp.ne.s32.totalorder %s151, %s167
      %p169 = scmp.eq.s32.totalorder %s30, 0
      %p170 = por %p168, %p169
      %s171 = ssub.s32 %s31, %s43
      %p172 = scmp.eq.s32.totalorder %s171, 0
      %s174 = sadd.s32 %s173, 1
      %s175 = scalar_select %p172, %s173, %s174
      %p178 = pneg %p172
      %p179 = scmp.eq.s32.totalorder %s24, 3
      %p180 = por %p178, %p179
      %p181 = scmp.ne.s32.totalorder %s173, %s176
      %p182 = scmp.eq.s32.totalorder %s24, 0
      %p183 = por %p181, %p182
      %p184 = scmp.ne.s32.totalorder %s173, %s176
      %p185 = scmp.eq.s32.totalorder %s29, 3
      %p186 = por %p184, %p185
      %p187 = scmp.ne.s32.totalorder %s176, %s177
      %p188 = scmp.eq.s32.totalorder %s29, 0
      %p189 = por %p187, %p188
      %p190 = scmp.ne.s32.totalorder %s176, %s177
      %p191 = scmp.eq.s32.totalorder %s30, 3
      %p192 = por %p190, %p191
      %p194 = scmp.ne.s32.totalorder %s177, %s193
      %p195 = scmp.eq.s32.totalorder %s30, 0
      %p196 = por %p194, %p195
      %p197 = scmp.le.s32.totalorder 1, %s24
      %p198 = scmp.lt.s32.totalorder %s24, 5
      %p199 = pnand %p197, %p198
      %p200 = pneg %p199
      // Predicated region
      $region9: #{graph_conv_forward.8} parent=5 // pred_check
        _
      $region10: #{graph_conv_forward.8} parent=5 // pred_check_branch
        %202 = sbr.rel (%p199) target = $region12
      $region11: #{graph_conv_forward.8} parent=5 // pred_region
        %s203 = ssub.s32 %s24, 1
        // Predicated region
        $region13: #{graph_conv_forward.8} parent=11 // pred_check
          %p204 = pneg %p111
        $region14: #{graph_conv_forward.8} parent=11 // pred_check_branch
          %206 = sbr.rel (%p204) target = $region16
        $region15: #{graph_conv_forward.8} parent=11 // pred_region
          %s208 = ssub.s32 1024, 1024
          %209 = vsyncadd [#allocation7], %s208
          %s210 = sshll.u32 [#allocation8], 4
          %s211 = int_to_ptr.vmem [resolvable:$true] %s210
          %216 = dma.hbm_to_vmem [thread:$0]  %s2, 1024, %s211, [#allocation7], 64, 64, 4
        $region16: #{graph_conv_forward.8} parent=11 // pred_fallthru
          _
      $region12: #{graph_conv_forward.8} parent=5 // pred_fallthru
        _
      %p217 = scmp.lt.s32.totalorder %s24, 4
      // Predicated region
      $region17: #{graph_conv_forward.8} parent=5 // pred_check
        %p218 = pneg %p217
      $region18: #{graph_conv_forward.8} parent=5 // pred_check_branch
        %220 = sbr.rel (%p218) target = $region20
      $region19: #{graph_conv_forward.8} parent=5 // pred_region
        // Predicated region
        $region21: #{graph_conv_forward.8} parent=19 // pred_check
          %p221 = pneg %p58
        $region22: #{graph_conv_forward.8} parent=19 // pred_check_branch
          %223 = sbr.rel (%p221) target = $region24
        $region23: #{graph_conv_forward.8} parent=19 // pred_region
          %s224 = sand.u32 %s48, 1
          %s225 = scalar_lea.sflag [#allocation4], %s224
          %s226 = sand.u32 %s48, 1
          %s227 = smul.addr %s226, 64
          %s228 = scalar_lea.vmem [#allocation3], %s227
          %s229 = smul.u32 16, %s31
          %s231 = ssub.s32 1024, 1024
          %232 = vsyncadd %s225, %s231
          %s233 = smul.addr %s229, 2
          %s234 = sadd.s32 %s32, %s233
          %s235 = smul.addr %s234, 64
          %s236 = scalar_lea.hbm %s0, %s235
          %s237 = sshll.u32 %s228, 4
          %s238 = int_to_ptr.vmem [resolvable:$true] %s237
          %243 = dma.hbm_to_vmem [thread:$0]  %s236, 1024, %s238, %s225, 128, 64, 4
        $region24: #{graph_conv_forward.8} parent=19 // pred_fallthru
          _
        // Predicated region
        $region25: #{graph_conv_forward.8} parent=19 // pred_check
          %p244 = pneg %p84
        $region26: #{graph_conv_forward.8} parent=19 // pred_check_branch
          %246 = sbr.rel (%p244) target = $region28
        $region27: #{graph_conv_forward.8} parent=19 // pred_region
          %s247 = sand.u32 %s24, 1
          %s248 = scalar_lea.sflag [#allocation7], %s247
          %s249 = sand.u32 %s74, 1
          %s250 = smul.addr %s249, 64
          %s251 = scalar_lea.vmem [#allocation6], %s250
          %s252 = smul.u32 16, %s32
          %s254 = ssub.s32 1024, 1024
          %255 = vsyncadd %s248, %s254
          %s256 = smul.addr %s252, 64
          %s257 = scalar_lea.hbm %s1, %s256
          %s258 = sshll.u32 %s251, 4
          %s259 = int_to_ptr.vmem [resolvable:$true] %s258
          %264 = dma.hbm_to_vmem [thread:$0]  %s257, 1024, %s259, %s248, 64, 64, 4
        $region28: #{graph_conv_forward.8} parent=19 // pred_fallthru
          _
      $region20: #{graph_conv_forward.8} parent=5 // pred_fallthru
        _
      %p265 = scmp.le.s32.totalorder 1, %s24
      %p266 = scmp.lt.s32.totalorder %s24, 5
      %p267 = pnand %p265, %p266
      %p268 = pneg %p267
      // Predicated region
      $region29: #{graph_conv_forward.8} parent=5 // pred_check
        _
      $region30: #{graph_conv_forward.8} parent=5 // pred_check_branch
        %270 = sbr.rel (%p267) target = $region32
      $region31: #{graph_conv_forward.8} parent=5 // pred_region
        %s271 = ssub.s32 %s24, 1
        %s272 = sand.u32 %s51, 1
        %s273 = scalar_lea.sflag [#allocation4], %s272
        %s274 = sand.u32 %s51, 1
        %s275 = smul.addr %s274, 64
        %s276 = scalar_lea.vmem [#allocation3], %s275
        // Predicated region
        $region33: #{graph_conv_forward.8} parent=31 // pred_check
          %p277 = pneg %p64
        $region34: #{graph_conv_forward.8} parent=31 // pred_check_branch
          %279 = sbr.rel (%p277) target = $region36
        $region35: #{graph_conv_forward.8} parent=31 // pred_region
          %280 = dma.done %s273, 1024
        $region36: #{graph_conv_forward.8} parent=31 // pred_fallthru
          _
        %s281 = sand.u32 %s29, 1
        %s282 = scalar_lea.sflag [#allocation7], %s281
        %s283 = sand.u32 %s77, 1
        %s284 = smul.addr %s283, 64
        %s285 = scalar_lea.vmem [#allocation6], %s284
        // Predicated region
        $region37: #{graph_conv_forward.8} parent=31 // pred_check
          %p286 = pneg %p90
        $region38: #{graph_conv_forward.8} parent=31 // pred_check_branch
          %288 = sbr.rel (%p286) target = $region40
        $region39: #{graph_conv_forward.8} parent=31 // pred_region
          %289 = dma.done %s282, 1024
        $region40: #{graph_conv_forward.8} parent=31 // pred_fallthru
          _
        // Predicated region
        $region41: #{graph_conv_forward.8} parent=31 // pred_check
          %p290 = pneg %p111
        $region42: #{graph_conv_forward.8} parent=31 // pred_check_branch
          %292 = sbr.rel (%p290) target = $region44
        $region43: #{graph_conv_forward.8} parent=31 // pred_region
          %293 = dma.done [#allocation7], 1024
        $region44: #{graph_conv_forward.8} parent=31 // pred_fallthru
          _
        %s294 = sand.u32 %s51, 1
        %s295 = scalar_lea.sflag [#allocation4], %s294
        %s296 = sand.u32 %s51, 1
        %s297 = smul.addr %s296, 64
        %s298 = scalar_lea.vmem [#allocation3], %s297
        %p299 = pneg %p64
        %p300 = pneg %p61
        %s301 = sand.u32 %s29, 1
        %s302 = scalar_lea.sflag [#allocation7], %s301
        %s303 = sand.u32 %s77, 1
        %s304 = smul.addr %s303, 64
        %s305 = scalar_lea.vmem [#allocation6], %s304
        %p306 = pneg %p90
        %p307 = pneg %p87
        %p308 = pneg %p111
        %p309 = pneg %p108
        %p310 = pneg %p137
        %p311 = pneg %p134
        %s312 = sand.u32 %s124, 1
        %s313 = scalar_lea.sflag [#allocation5], %s312
        %s314 = sand.u32 %s124, 1
        %s315 = smul.addr %s314, 64
        %s316 = scalar_lea.vmem [#allocation9], %s315
        %p317 = pneg %p163
        %p318 = pneg %p160
        %s319 = sand.u32 %s29, 1
        %s320 = scalar_lea.sflag [#allocation11], %s319
        %s321 = sand.u32 %s150, 1
        %s322 = scalar_lea.vmem [#allocation10], %s321
        %p323 = pneg %p189
        %p324 = pneg %p186
        %s325 = sand.u32 %s29, 1
        %s326 = scalar_lea.sflag [#allocation11], %s325
        %s327 = sand.u32 %s176, 1
        %s328 = scalar_lea.vmem [#allocation12], %s327
        %s329 = smul.u32 16, %s33
        %s330 = smul.u32 16, %s34
        %s331 = smul.u32 16, %s33
        %p333 = scmp.eq.s32.totalorder %s34, 0
        // Predicated region
        $region45: #{graph_conv_forward.8} parent=31 // pred_check
          %p334 = pneg %p333
        $region46: #{graph_conv_forward.8} parent=31 // pred_check_branch
          %336 = sbr.rel (%p334) target = $region48
        $region47: #{graph_conv_forward.8} parent=31 // pred_region
          %337 = vst [vmem:[#allocation2] sm:$0xff] 0.0
          %338 = vst [vmem:[#allocation2 + $0x8] sm:$0xff] 0.0
          %339 = vst [vmem:[#allocation2 + $0x10] sm:$0xff] 0.0
          %340 = vst [vmem:[#allocation2 + $0x18] sm:$0xff] 0.0
          %341 = vst [vmem:[#allocation2 + $0x20] sm:$0xff] 0.0
          %342 = vst [vmem:[#allocation2 + $0x28] sm:$0xff] 0.0
          %343 = vst [vmem:[#allocation2 + $0x30] sm:$0xff] 0.0
          %344 = vst [vmem:[#allocation2 + $0x38] sm:$0xff] 0.0
          %345 = vst [vmem:[#allocation2 + $0x40] sm:$0xff] 0.0
          %346 = vst [vmem:[#allocation2 + $0x48] sm:$0xff] 0.0
          %347 = vst [vmem:[#allocation2 + $0x50] sm:$0xff] 0.0
          %348 = vst [vmem:[#allocation2 + $0x58] sm:$0xff] 0.0
          %349 = vst [vmem:[#allocation2 + $0x60] sm:$0xff] 0.0
          %350 = vst [vmem:[#allocation2 + $0x68] sm:$0xff] 0.0
          %351 = vst [vmem:[#allocation2 + $0x70] sm:$0xff] 0.0
          %352 = vst [vmem:[#allocation2 + $0x78] sm:$0xff] 0.0
        $region48: #{graph_conv_forward.8} parent=31 // pred_fallthru
          _
        %v353 = vld [vmem:[#allocation2] sm:$0xff]
        %v354 = vld [vmem:[#allocation2 + $0x8] sm:$0xff]
        %v355 = vld [vmem:[#allocation2 + $0x10] sm:$0xff]
        %v356 = vld [vmem:[#allocation2 + $0x18] sm:$0xff]
        %v357 = vld [vmem:[#allocation2 + $0x20] sm:$0xff]
        %v358 = vld [vmem:[#allocation2 + $0x28] sm:$0xff]
        %v359 = vld [vmem:[#allocation2 + $0x30] sm:$0xff]
        %v360 = vld [vmem:[#allocation2 + $0x38] sm:$0xff]
        %v361 = vld [vmem:[#allocation2 + $0x40] sm:$0xff]
        %v362 = vld [vmem:[#allocation2 + $0x48] sm:$0xff]
        %v363 = vld [vmem:[#allocation2 + $0x50] sm:$0xff]
        %v364 = vld [vmem:[#allocation2 + $0x58] sm:$0xff]
        %v365 = vld [vmem:[#allocation2 + $0x60] sm:$0xff]
        %v366 = vld [vmem:[#allocation2 + $0x68] sm:$0xff]
        %v367 = vld [vmem:[#allocation2 + $0x70] sm:$0xff]
        %v368 = vld [vmem:[#allocation2 + $0x78] sm:$0xff]
        %v369 = vld [vmem:[%s276] sm:$0xf]
        %v370 = vld [vmem:[%s276 + $0x4] sm:$0xf]
        %v371 = vld [vmem:[%s276 + $0x8] sm:$0xf]
        %v372 = vld [vmem:[%s276 + $0xc] sm:$0xf]
        %v373 = vld [vmem:[%s276 + $0x10] sm:$0xf]
        %v374 = vld [vmem:[%s276 + $0x14] sm:$0xf]
        %v375 = vld [vmem:[%s276 + $0x18] sm:$0xf]
        %v376 = vld [vmem:[%s276 + $0x1c] sm:$0xf]
        %v377 = vld [vmem:[%s276 + $0x20] sm:$0xf]
        %v378 = vld [vmem:[%s276 + $0x24] sm:$0xf]
        %v379 = vld [vmem:[%s276 + $0x28] sm:$0xf]
        %v380 = vld [vmem:[%s276 + $0x2c] sm:$0xf]
        %v381 = vld [vmem:[%s276 + $0x30] sm:$0xf]
        %v382 = vld [vmem:[%s276 + $0x34] sm:$0xf]
        %v383 = vld [vmem:[%s276 + $0x38] sm:$0xf]
        %v384 = vld [vmem:[%s276 + $0x3c] sm:$0xf]
        %v385 = vld [vmem:[%s285] sm:$0xf]
        %v386 = vld [vmem:[%s285 + $0x4] sm:$0xf]
        %v387 = vld [vmem:[%s285 + $0x8] sm:$0xf]
        %v388 = vld [vmem:[%s285 + $0xc] sm:$0xf]
        %v389 = vld [vmem:[%s285 + $0x10] sm:$0xf]
        %v390 = vld [vmem:[%s285 + $0x14] sm:$0xf]
        %v391 = vld [vmem:[%s285 + $0x18] sm:$0xf]
        %v392 = vld [vmem:[%s285 + $0x1c] sm:$0xf]
        %v393 = vld [vmem:[%s285 + $0x20] sm:$0xf]
        %v394 = vld [vmem:[%s285 + $0x24] sm:$0xf]
        %v395 = vld [vmem:[%s285 + $0x28] sm:$0xf]
        %v396 = vld [vmem:[%s285 + $0x2c] sm:$0xf]
        %v397 = vld [vmem:[%s285 + $0x30] sm:$0xf]
        %v398 = vld [vmem:[%s285 + $0x34] sm:$0xf]
        %v399 = vld [vmem:[%s285 + $0x38] sm:$0xf]
        %v400 = vld [vmem:[%s285 + $0x3c] sm:$0xf]
        %v417 = vunpack.c.l.b16 %v369
        %v418 = vunpack.c.l.b16 %v370
        %v419 = vunpack.c.l.b16 %v371
        %v420 = vunpack.c.l.b16 %v372
        %v421 = vunpack.c.l.b16 %v373
        %v422 = vunpack.c.l.b16 %v374
        %v423 = vunpack.c.l.b16 %v375
        %v424 = vunpack.c.l.b16 %v376
        %v425 = vunpack.c.l.b16 %v377
        %v426 = vunpack.c.l.b16 %v378
        %v427 = vunpack.c.l.b16 %v379
        %v428 = vunpack.c.l.b16 %v380
        %v429 = vunpack.c.l.b16 %v381
        %v430 = vunpack.c.l.b16 %v382
        %v431 = vunpack.c.l.b16 %v383
        %v432 = vunpack.c.l.b16 %v384
        %v433 = vpack.c.b16 %v418, %v417
        %v434 = vpack.c.b16 %v420, %v419
        %v435 = vpack.c.b16 %v422, %v421
        %v436 = vpack.c.b16 %v424, %v423
        %v437 = vpack.c.b16 %v426, %v425
        %v438 = vpack.c.b16 %v428, %v427
        %v439 = vpack.c.b16 %v430, %v429
        %v440 = vpack.c.b16 %v432, %v431
        %v465 = vunpack.c.l.b16 %v385
        %v466 = vunpack.c.l.b16 %v386
        %v467 = vunpack.c.l.b16 %v387
        %v468 = vunpack.c.l.b16 %v388
        %v469 = vunpack.c.l.b16 %v389
        %v470 = vunpack.c.l.b16 %v390
        %v471 = vunpack.c.l.b16 %v391
        %v472 = vunpack.c.l.b16 %v392
        %v473 = vunpack.c.l.b16 %v393
        %v474 = vunpack.c.l.b16 %v394
        %v475 = vunpack.c.l.b16 %v395
        %v476 = vunpack.c.l.b16 %v396
        %v477 = vunpack.c.l.b16 %v397
        %v478 = vunpack.c.l.b16 %v398
        %v479 = vunpack.c.l.b16 %v399
        %v480 = vunpack.c.l.b16 %v400
        %v481 = vpack.c.b16 %v466, %v465
        %v482 = vpack.c.b16 %v468, %v467
        %v483 = vpack.c.b16 %v470, %v469
        %v484 = vpack.c.b16 %v472, %v471
        %v485 = vpack.c.b16 %v474, %v473
        %v486 = vpack.c.b16 %v476, %v475
        %v487 = vpack.c.b16 %v478, %v477
        %v488 = vpack.c.b16 %v480, %v479
        %497 = vmatprep.subr.bf16.mxu0 0
        %498 = vmatpush1.bf16.msra.mxu0 %v481
        %499 = vmatprep.subr.bf16.mxu0 0
        %500 = vmatpush1.bf16.msra.mxu0 %v482
        %501 = vmatprep.subr.bf16.mxu0 0
        %502 = vmatpush1.bf16.msra.mxu0 %v483
        %503 = vmatprep.subr.bf16.mxu0 0
        %504 = vmatpush1.bf16.msra.mxu0 %v484
        %505 = vmatprep.subr.bf16.mxu0 0
        %506 = vmatpush1.bf16.msra.mxu0 %v485
        %507 = vmatprep.subr.bf16.mxu0 0
        %508 = vmatpush1.bf16.msra.mxu0 %v486
        %509 = vmatprep.subr.bf16.mxu0 0
        %510 = vmatpush1.bf16.msra.mxu0 %v487
        %511 = vmatprep.subr.bf16.mxu0 0
        %512 = vmatpush1.bf16.msra.mxu0 %v488
        %513 = vmatprep.subr.bf16.mxu0 0
        %514 = vmatpush1.bf16.msra.mxu0 0
        %515 = vmatprep.subr.bf16.mxu0 0
        %516 = vmatpush1.bf16.msra.mxu0 0
        %517 = vmatprep.subr.bf16.mxu0 0
        %518 = vmatpush1.bf16.msra.mxu0 0
        %519 = vmatprep.subr.bf16.mxu0 0
        %520 = vmatpush1.bf16.msra.mxu0 0
        %521 = vmatprep.subr.bf16.mxu0 0
        %522 = vmatpush1.bf16.msra.mxu0 0
        %523 = vmatprep.subr.bf16.mxu0 0
        %524 = vmatpush1.bf16.msra.mxu0 0
        %525 = vmatprep.subr.bf16.mxu0 0
        %526 = vmatpush1.bf16.msra.mxu0 0
        %527 = vmatprep.subr.bf16.mxu0 0
        %528 = vmatpush1.bf16.msra.mxu0 0
        %529 = vmatprep.mubr.bf16.mxu0 0
        %530 = vmatmul.mubr.bf16.gmra.mrb[0].mxu0 %v433
        %v531 = vpop.f32.mrb[0].mxu0
        %v532 = vadd.f32 0.0, %v531
        %v533 = vpop.f32.mrb[0].mxu0
        %v534 = vpop.f32.mrb[0].mxu0
        %v535 = vadd.f32 0.0, %v534
        %v536 = vpop.f32.mrb[0].mxu0
        %537 = vmatprep.mubr.bf16.mxu0 0
        %538 = vmatmul.mubr.bf16.gmra.mrb[0].mxu0 %v434
        %v539 = vpop.f32.mrb[0].mxu0
        %v540 = vadd.f32 0.0, %v539
        %v541 = vpop.f32.mrb[0].mxu0
        %v542 = vpop.f32.mrb[0].mxu0
        %v543 = vadd.f32 0.0, %v542
        %v544 = vpop.f32.mrb[0].mxu0
        %545 = vmatprep.mubr.bf16.mxu0 0
        %546 = vmatmul.mubr.bf16.gmra.mrb[0].mxu0 %v435
        %v547 = vpop.f32.mrb[0].mxu0
        %v548 = vadd.f32 0.0, %v547
        %v549 = vpop.f32.mrb[0].mxu0
        %v550 = vpop.f32.mrb[0].mxu0
        %v551 = vadd.f32 0.0, %v550
        %v552 = vpop.f32.mrb[0].mxu0
        %553 = vmatprep.mubr.bf16.mxu0 0
        %554 = vmatmul.mubr.bf16.gmra.mrb[0].mxu0 %v436
        %v555 = vpop.f32.mrb[0].mxu0
        %v556 = vadd.f32 0.0, %v555
        %v557 = vpop.f32.mrb[0].mxu0
        %v558 = vpop.f32.mrb[0].mxu0
        %v559 = vadd.f32 0.0, %v558
        %v560 = vpop.f32.mrb[0].mxu0
        %561 = vmatprep.mubr.bf16.mxu0 0
        %562 = vmatmul.mubr.bf16.gmra.mrb[0].mxu0 %v437
        %v563 = vpop.f32.mrb[0].mxu0
        %v564 = vadd.f32 0.0, %v563
        %v565 = vpop.f32.mrb[0].mxu0
        %v566 = vpop.f32.mrb[0].mxu0
        %v567 = vadd.f32 0.0, %v566
        %v568 = vpop.f32.mrb[0].mxu0
        %569 = vmatprep.mubr.bf16.mxu0 0
        %570 = vmatmul.mubr.bf16.gmra.mrb[0].mxu0 %v438
        %v571 = vpop.f32.mrb[0].mxu0
        %v572 = vadd.f32 0.0, %v571
        %v573 = vpop.f32.mrb[0].mxu0
        %v574 = vpop.f32.mrb[0].mxu0
        %v575 = vadd.f32 0.0, %v574
        %v576 = vpop.f32.mrb[0].mxu0
        %577 = vmatprep.mubr.bf16.mxu0 0
        %578 = vmatmul.mubr.bf16.gmra.mrb[0].mxu0 %v439
        %v579 = vpop.f32.mrb[0].mxu0
        %v580 = vadd.f32 0.0, %v579
        %v581 = vpop.f32.mrb[0].mxu0
        %v582 = vpop.f32.mrb[0].mxu0
        %v583 = vadd.f32 0.0, %v582
        %v584 = vpop.f32.mrb[0].mxu0
        %585 = vmatprep.mubr.bf16.mxu0 0
        %586 = vmatmul.mubr.bf16.gmra.mrb[0].mxu0 %v440
        %v587 = vpop.f32.mrb[0].mxu0
        %v588 = vadd.f32 0.0, %v587
        %v589 = vpop.f32.mrb[0].mxu0
        %v590 = vpop.f32.mrb[0].mxu0
        %v591 = vadd.f32 0.0, %v590
        %v592 = vpop.f32.mrb[0].mxu0
        %593 = vdwg.mxu0
        %v594 = vadd.f32 %v353, %v532
        %v595 = vadd.f32 %v354, %v535
        %v596 = vadd.f32 %v355, %v540
        %v597 = vadd.f32 %v356, %v543
        %v598 = vadd.f32 %v357, %v548
        %v599 = vadd.f32 %v358, %v551
        %v600 = vadd.f32 %v359, %v556
        %v601 = vadd.f32 %v360, %v559
        %v602 = vadd.f32 %v361, %v564
        %v603 = vadd.f32 %v362, %v567
        %v604 = vadd.f32 %v363, %v572
        %v605 = vadd.f32 %v364, %v575
        %v606 = vadd.f32 %v365, %v580
        %v607 = vadd.f32 %v366, %v583
        %v608 = vadd.f32 %v367, %v588
        %v609 = vadd.f32 %v368, %v591
        %610 = vst [vmem:[#allocation2] sm:$0xff] %v594
        %611 = vst [vmem:[#allocation2 + $0x8] sm:$0xff] %v595
        %612 = vst [vmem:[#allocation2 + $0x10] sm:$0xff] %v596
        %613 = vst [vmem:[#allocation2 + $0x18] sm:$0xff] %v597
        %614 = vst [vmem:[#allocation2 + $0x20] sm:$0xff] %v598
        %615 = vst [vmem:[#allocation2 + $0x28] sm:$0xff] %v599
        %616 = vst [vmem:[#allocation2 + $0x30] sm:$0xff] %v600
        %617 = vst [vmem:[#allocation2 + $0x38] sm:$0xff] %v601
        %618 = vst [vmem:[#allocation2 + $0x40] sm:$0xff] %v602
        %619 = vst [vmem:[#allocation2 + $0x48] sm:$0xff] %v603
        %620 = vst [vmem:[#allocation2 + $0x50] sm:$0xff] %v604
        %621 = vst [vmem:[#allocation2 + $0x58] sm:$0xff] %v605
        %622 = vst [vmem:[#allocation2 + $0x60] sm:$0xff] %v606
        %623 = vst [vmem:[#allocation2 + $0x68] sm:$0xff] %v607
        %624 = vst [vmem:[#allocation2 + $0x70] sm:$0xff] %v608
        %625 = vst [vmem:[#allocation2 + $0x78] sm:$0xff] %v609
        %p626 = scmp.eq.s32.totalorder %s34, 1
        // Predicated region
        $region49: #{graph_conv_forward.8} parent=31 // pred_check
          %p627 = pneg %p626
        $region50: #{graph_conv_forward.8} parent=31 // pred_check_branch
          %629 = sbr.rel (%p627) target = $region52
        $region51: #{graph_conv_forward.8} parent=31 // pred_region
          %v630 = vld [vmem:[#allocation2] sm:$0xff]
          %v631 = vld [vmem:[#allocation2 + $0x8] sm:$0xff]
          %v632 = vld [vmem:[#allocation2 + $0x10] sm:$0xff]
          %v633 = vld [vmem:[#allocation2 + $0x18] sm:$0xff]
          %v634 = vld [vmem:[#allocation2 + $0x20] sm:$0xff]
          %v635 = vld [vmem:[#allocation2 + $0x28] sm:$0xff]
          %v636 = vld [vmem:[#allocation2 + $0x30] sm:$0xff]
          %v637 = vld [vmem:[#allocation2 + $0x38] sm:$0xff]
          %v638 = vld [vmem:[#allocation2 + $0x40] sm:$0xff]
          %v639 = vld [vmem:[#allocation2 + $0x48] sm:$0xff]
          %v640 = vld [vmem:[#allocation2 + $0x50] sm:$0xff]
          %v641 = vld [vmem:[#allocation2 + $0x58] sm:$0xff]
          %v642 = vld [vmem:[#allocation2 + $0x60] sm:$0xff]
          %v643 = vld [vmem:[#allocation2 + $0x68] sm:$0xff]
          %v644 = vld [vmem:[#allocation2 + $0x70] sm:$0xff]
          %v645 = vld [vmem:[#allocation2 + $0x78] sm:$0xff]
          %v646 = vpack.c.bf16 %v631, %v630
          %v647 = vpack.c.bf16 %v633, %v632
          %v648 = vpack.c.bf16 %v635, %v634
          %v649 = vpack.c.bf16 %v637, %v636
          %v650 = vpack.c.bf16 %v639, %v638
          %v651 = vpack.c.bf16 %v641, %v640
          %v652 = vpack.c.bf16 %v643, %v642
          %v653 = vpack.c.bf16 %v645, %v644
          %v654 = vld [vmem:[#allocation8] sm:$0xf]
          %v655 = vld [vmem:[#allocation8 + $0x4] sm:$0xf]
          %v656 = vld [vmem:[#allocation8 + $0x8] sm:$0xf]
          %v657 = vld [vmem:[#allocation8 + $0xc] sm:$0xf]
          %v658 = vld [vmem:[#allocation8 + $0x10] sm:$0xf]
          %v659 = vld [vmem:[#allocation8 + $0x14] sm:$0xf]
          %v660 = vld [vmem:[#allocation8 + $0x18] sm:$0xf]
          %v661 = vld [vmem:[#allocation8 + $0x1c] sm:$0xf]
          %v662 = vld [vmem:[#allocation8 + $0x20] sm:$0xf]
          %v663 = vld [vmem:[#allocation8 + $0x24] sm:$0xf]
          %v664 = vld [vmem:[#allocation8 + $0x28] sm:$0xf]
          %v665 = vld [vmem:[#allocation8 + $0x2c] sm:$0xf]
          %v666 = vld [vmem:[#allocation8 + $0x30] sm:$0xf]
          %v667 = vld [vmem:[#allocation8 + $0x34] sm:$0xf]
          %v668 = vld [vmem:[#allocation8 + $0x38] sm:$0xf]
          %v669 = vld [vmem:[#allocation8 + $0x3c] sm:$0xf]
          %v686 = vunpack.c.l.b16 %v654
          %v687 = vunpack.c.l.b16 %v655
          %v688 = vunpack.c.l.b16 %v656
          %v689 = vunpack.c.l.b16 %v657
          %v690 = vunpack.c.l.b16 %v658
          %v691 = vunpack.c.l.b16 %v659
          %v692 = vunpack.c.l.b16 %v660
          %v693 = vunpack.c.l.b16 %v661
          %v694 = vunpack.c.l.b16 %v662
          %v695 = vunpack.c.l.b16 %v663
          %v696 = vunpack.c.l.b16 %v664
          %v697 = vunpack.c.l.b16 %v665
          %v698 = vunpack.c.l.b16 %v666
          %v699 = vunpack.c.l.b16 %v667
          %v700 = vunpack.c.l.b16 %v668
          %v701 = vunpack.c.l.b16 %v669
          %v702 = vpack.c.b16 %v687, %v686
          %v703 = vpack.c.b16 %v689, %v688
          %v704 = vpack.c.b16 %v691, %v690
          %v705 = vpack.c.b16 %v693, %v692
          %v706 = vpack.c.b16 %v695, %v694
          %v707 = vpack.c.b16 %v697, %v696
          %v708 = vpack.c.b16 %v699, %v698
          %v709 = vpack.c.b16 %v701, %v700
          %718 = vmatprep.subr.bf16.mxu0 0
          %719 = vmatpush1.bf16.msra.mxu0 %v702
          %720 = vmatprep.subr.bf16.mxu0 0
          %721 = vmatpush1.bf16.msra.mxu0 %v703
          %722 = vmatprep.subr.bf16.mxu0 0
          %723 = vmatpush1.bf16.msra.mxu0 %v704
          %724 = vmatprep.subr.bf16.mxu0 0
          %725 = vmatpush1.bf16.msra.mxu0 %v705
          %726 = vmatprep.subr.bf16.mxu0 0
          %727 = vmatpush1.bf16.msra.mxu0 %v706
          %728 = vmatprep.subr.bf16.mxu0 0
          %729 = vmatpush1.bf16.msra.mxu0 %v707
          %730 = vmatprep.subr.bf16.mxu0 0
          %731 = vmatpush1.bf16.msra.mxu0 %v708
          %732 = vmatprep.subr.bf16.mxu0 0
          %733 = vmatpush1.bf16.msra.mxu0 %v709
          %734 = vmatprep.subr.bf16.mxu0 0
          %735 = vmatpush1.bf16.msra.mxu0 0
          %736 = vmatprep.subr.bf16.mxu0 0
          %737 = vmatpush1.bf16.msra.mxu0 0
          %738 = vmatprep.subr.bf16.mxu0 0
          %739 = vmatpush1.bf16.msra.mxu0 0
          %740 = vmatprep.subr.bf16.mxu0 0
          %741 = vmatpush1.bf16.msra.mxu0 0
          %742 = vmatprep.subr.bf16.mxu0 0
          %743 = vmatpush1.bf16.msra.mxu0 0
          %744 = vmatprep.subr.bf16.mxu0 0
          %745 = vmatpush1.bf16.msra.mxu0 0
          %746 = vmatprep.subr.bf16.mxu0 0
          %747 = vmatpush1.bf16.msra.mxu0 0
          %748 = vmatprep.subr.bf16.mxu0 0
          %749 = vmatpush1.bf16.msra.mxu0 0
          %750 = vmatprep.mubr.bf16.mxu0 0
          %751 = vmatmul.mubr.bf16.gmra.mrb[0].mxu0 %v646
          %v752 = vpop.f32.mrb[0].mxu0
          %v753 = vadd.f32 0.0, %v752
          %v754 = vpop.f32.mrb[0].mxu0
          %v755 = vpop.f32.mrb[0].mxu0
          %v756 = vadd.f32 0.0, %v755
          %v757 = vpop.f32.mrb[0].mxu0
          %758 = vmatprep.mubr.bf16.mxu0 0
          %759 = vmatmul.mubr.bf16.gmra.mrb[0].mxu0 %v647
          %v760 = vpop.f32.mrb[0].mxu0
          %v761 = vadd.f32 0.0, %v760
          %v762 = vpop.f32.mrb[0].mxu0
          %v763 = vpop.f32.mrb[0].mxu0
          %v764 = vadd.f32 0.0, %v763
          %v765 = vpop.f32.mrb[0].mxu0
          %766 = vmatprep.mubr.bf16.mxu0 0
          %767 = vmatmul.mubr.bf16.gmra.mrb[0].mxu0 %v648
          %v768 = vpop.f32.mrb[0].mxu0
          %v769 = vadd.f32 0.0, %v768
          %v770 = vpop.f32.mrb[0].mxu0
          %v771 = vpop.f32.mrb[0].mxu0
          %v772 = vadd.f32 0.0, %v771
          %v773 = vpop.f32.mrb[0].mxu0
          %774 = vmatprep.mubr.bf16.mxu0 0
          %775 = vmatmul.mubr.bf16.gmra.mrb[0].mxu0 %v649
          %v776 = vpop.f32.mrb[0].mxu0
          %v777 = vadd.f32 0.0, %v776
          %v778 = vpop.f32.mrb[0].mxu0
          %v779 = vpop.f32.mrb[0].mxu0
          %v780 = vadd.f32 0.0, %v779
          %v781 = vpop.f32.mrb[0].mxu0
          %782 = vmatprep.mubr.bf16.mxu0 0
          %783 = vmatmul.mubr.bf16.gmra.mrb[0].mxu0 %v650
          %v784 = vpop.f32.mrb[0].mxu0
          %v785 = vadd.f32 0.0, %v784
          %v786 = vpop.f32.mrb[0].mxu0
          %v787 = vpop.f32.mrb[0].mxu0
          %v788 = vadd.f32 0.0, %v787
          %v789 = vpop.f32.mrb[0].mxu0
          %790 = vmatprep.mubr.bf16.mxu0 0
          %791 = vmatmul.mubr.bf16.gmra.mrb[0].mxu0 %v651
          %v792 = vpop.f32.mrb[0].mxu0
          %v793 = vadd.f32 0.0, %v792
          %v794 = vpop.f32.mrb[0].mxu0
          %v795 = vpop.f32.mrb[0].mxu0
          %v796 = vadd.f32 0.0, %v795
          %v797 = vpop.f32.mrb[0].mxu0
          %798 = vmatprep.mubr.bf16.mxu0 0
          %799 = vmatmul.mubr.bf16.gmra.mrb[0].mxu0 %v652
          %v800 = vpop.f32.mrb[0].mxu0
          %v801 = vadd.f32 0.0, %v800
          %v802 = vpop.f32.mrb[0].mxu0
          %v803 = vpop.f32.mrb[0].mxu0
          %v804 = vadd.f32 0.0, %v803
          %v805 = vpop.f32.mrb[0].mxu0
          %806 = vmatprep.mubr.bf16.mxu0 0
          %807 = vmatmul.mubr.bf16.gmra.mrb[0].mxu0 %v653
          %v808 = vpop.f32.mrb[0].mxu0
          %v809 = vadd.f32 0.0, %v808
          %v810 = vpop.f32.mrb[0].mxu0
          %v811 = vpop.f32.mrb[0].mxu0
          %v812 = vadd.f32 0.0, %v811
          %v813 = vpop.f32.mrb[0].mxu0
          %814 = vdwg.mxu0
          %v815 = vpack.c.bf16 %v756, %v753
          %v816 = vpack.c.bf16 %v764, %v761
          %v817 = vpack.c.bf16 %v772, %v769
          %v818 = vpack.c.bf16 %v780, %v777
          %v819 = vpack.c.bf16 %v788, %v785
          %v820 = vpack.c.bf16 %v796, %v793
          %v821 = vpack.c.bf16 %v804, %v801
          %v822 = vpack.c.bf16 %v812, %v809
          %v831 = vunpack.c.l.b16 %v815
          %v832 = vunpack.c.h.b16 %v815
          %v833 = vunpack.c.l.b16 %v816
          %v834 = vunpack.c.h.b16 %v816
          %v835 = vunpack.c.l.b16 %v817
          %v836 = vunpack.c.h.b16 %v817
          %v837 = vunpack.c.l.b16 %v818
          %v838 = vunpack.c.h.b16 %v818
          %v839 = vunpack.c.l.b16 %v819
          %v840 = vunpack.c.h.b16 %v819
          %v841 = vunpack.c.l.b16 %v820
          %v842 = vunpack.c.h.b16 %v820
          %v843 = vunpack.c.l.b16 %v821
          %v844 = vunpack.c.h.b16 %v821
          %v845 = vunpack.c.l.b16 %v822
          %v846 = vunpack.c.h.b16 %v822
          %v847 = vpack.c.b16 %v831, %v831
          %v848 = vpack.c.b16 %v832, %v832
          %v849 = vpack.c.b16 %v833, %v833
          %v850 = vpack.c.b16 %v834, %v834
          %v851 = vpack.c.b16 %v835, %v835
          %v852 = vpack.c.b16 %v836, %v836
          %v853 = vpack.c.b16 %v837, %v837
          %v854 = vpack.c.b16 %v838, %v838
          %v855 = vpack.c.b16 %v839, %v839
          %v856 = vpack.c.b16 %v840, %v840
          %v857 = vpack.c.b16 %v841, %v841
          %v858 = vpack.c.b16 %v842, %v842
          %v859 = vpack.c.b16 %v843, %v843
          %v860 = vpack.c.b16 %v844, %v844
          %v861 = vpack.c.b16 %v845, %v845
          %v862 = vpack.c.b16 %v846, %v846
          %879 = vst [vmem:[%s316] sm:$0xf] %v847
          %880 = vst [vmem:[%s316 + $0x4] sm:$0xf] %v848
          %881 = vst [vmem:[%s316 + $0x8] sm:$0xf] %v849
          %882 = vst [vmem:[%s316 + $0xc] sm:$0xf] %v850
          %883 = vst [vmem:[%s316 + $0x10] sm:$0xf] %v851
          %884 = vst [vmem:[%s316 + $0x14] sm:$0xf] %v852
          %885 = vst [vmem:[%s316 + $0x18] sm:$0xf] %v853
          %886 = vst [vmem:[%s316 + $0x1c] sm:$0xf] %v854
          %887 = vst [vmem:[%s316 + $0x20] sm:$0xf] %v855
          %888 = vst [vmem:[%s316 + $0x24] sm:$0xf] %v856
          %889 = vst [vmem:[%s316 + $0x28] sm:$0xf] %v857
          %890 = vst [vmem:[%s316 + $0x2c] sm:$0xf] %v858
          %891 = vst [vmem:[%s316 + $0x30] sm:$0xf] %v859
          %892 = vst [vmem:[%s316 + $0x34] sm:$0xf] %v860
          %893 = vst [vmem:[%s316 + $0x38] sm:$0xf] %v861
          %894 = vst [vmem:[%s316 + $0x3c] sm:$0xf] %v862
          %v895 = vadd.f32 %v753, %v756
          %v896 = vadd.f32 %v895, %v761
          %v897 = vadd.f32 %v896, %v764
          %v898 = vadd.f32 %v897, %v769
          %v899 = vadd.f32 %v898, %v772
          %v900 = vadd.f32 %v899, %v777
          %v901 = vadd.f32 %v900, %v780
          %v902 = vadd.f32 %v901, %v785
          %v903 = vadd.f32 %v902, %v788
          %v904 = vadd.f32 %v903, %v793
          %v905 = vadd.f32 %v904, %v796
          %v906 = vadd.f32 %v905, %v801
          %v907 = vadd.f32 %v906, %v804
          %v908 = vadd.f32 %v907, %v809
          %v909 = vadd.f32 %v908, %v812
          %v910 = vrot.slane %v909, 4
          %v911 = vadd.f32 %v909, %v910
          %v912 = vrot.slane %v911, 2
          %v913 = vadd.f32 %v911, %v912
          %v914 = vrot.slane %v913, 1
          %v915 = vadd.f32 %v913, %v914
          %916 = vst [vmem:[%s322] sm:$0x1] %v915
          %v917 = vmul.f32 %v753, %v753
          %v918 = vmul.f32 %v756, %v756
          %v919 = vmul.f32 %v761, %v761
          %v920 = vmul.f32 %v764, %v764
          %v921 = vmul.f32 %v769, %v769
          %v922 = vmul.f32 %v772, %v772
          %v923 = vmul.f32 %v777, %v777
          %v924 = vmul.f32 %v780, %v780
          %v925 = vmul.f32 %v785, %v785
          %v926 = vmul.f32 %v788, %v788
          %v927 = vmul.f32 %v793, %v793
          %v928 = vmul.f32 %v796, %v796
          %v929 = vmul.f32 %v801, %v801
          %v930 = vmul.f32 %v804, %v804
          %v931 = vmul.f32 %v809, %v809
          %v932 = vmul.f32 %v812, %v812
          %v933 = vadd.f32 %v917, %v918
          %v934 = vadd.f32 %v933, %v919
          %v935 = vadd.f32 %v934, %v920
          %v936 = vadd.f32 %v935, %v921
          %v937 = vadd.f32 %v936, %v922
          %v938 = vadd.f32 %v937, %v923
          %v939 = vadd.f32 %v938, %v924
          %v940 = vadd.f32 %v939, %v925
          %v941 = vadd.f32 %v940, %v926
          %v942 = vadd.f32 %v941, %v927
          %v943 = vadd.f32 %v942, %v928
          %v944 = vadd.f32 %v943, %v929
          %v945 = vadd.f32 %v944, %v930
          %v946 = vadd.f32 %v945, %v931
          %v947 = vadd.f32 %v946, %v932
          %v948 = vrot.slane %v947, 4
          %v949 = vadd.f32 %v947, %v948
          %v950 = vrot.slane %v949, 2
          %v951 = vadd.f32 %v949, %v950
          %v952 = vrot.slane %v951, 1
          %v953 = vadd.f32 %v951, %v952
          %954 = vst [vmem:[%s328] sm:$0x1] %v953
        $region52: #{graph_conv_forward.8} parent=31 // pred_fallthru
          _
        %s955 = sand.u32 %s124, 1
        %s956 = scalar_lea.sflag [#allocation5], %s955
        %s957 = sand.u32 %s124, 1
        %s958 = smul.addr %s957, 64
        %s959 = scalar_lea.vmem [#allocation9], %s958
        %s960 = sand.u32 %s29, 1
        %s961 = scalar_lea.sflag [#allocation11], %s960
        %s962 = sand.u32 %s150, 1
        %s963 = scalar_lea.vmem [#allocation10], %s962
        %s964 = sand.u32 %s29, 1
        %s965 = scalar_lea.sflag [#allocation11], %s964
        %s966 = sand.u32 %s176, 1
        %s967 = scalar_lea.vmem [#allocation12], %s966
        // Predicated region
        $region53: #{graph_conv_forward.8} parent=31 // pred_check
          %p968 = pneg %p134
        $region54: #{graph_conv_forward.8} parent=31 // pred_check_branch
          %970 = sbr.rel (%p968) target = $region56
        $region55: #{graph_conv_forward.8} parent=31 // pred_region
          %s971 = smul.u32 16, %s33
          %s973 = ssub.s32 1024, 1024
          %974 = vsyncadd %s956, %s973
          %s975 = smul.addr %s971, 64
          %s976 = scalar_lea.hbm %s3, %s975
          %s977 = sshll.u32 %s959, 4
          %s978 = int_to_ptr.vmem [resolvable:$true] %s977
          %983 = dma.vmem_to_hbm [thread:$0]  %s978, 1024, %s976, %s956, 64, 64, 4
        $region56: #{graph_conv_forward.8} parent=31 // pred_fallthru
          _
        // Predicated region
        $region57: #{graph_conv_forward.8} parent=31 // pred_check
          %p984 = pneg %p160
        $region58: #{graph_conv_forward.8} parent=31 // pred_check_branch
          %986 = sbr.rel (%p984) target = $region60
        $region59: #{graph_conv_forward.8} parent=31 // pred_region
          %s988 = ssub.s32 16, 16
          %989 = vsyncadd %s961, %s988
          %s990 = smul.addr %s33, 16
          %s991 = scalar_lea.hbm %s4, %s990
          %s993 = sshll.u32 %s963, 4
          %s994 = int_to_ptr.vmem [resolvable:$true] %s993
          %996 = dma.vmem_to_hbm [thread:$0]  %s994, 16, %s991, %s961
        $region60: #{graph_conv_forward.8} parent=31 // pred_fallthru
          _
        // Predicated region
        $region61: #{graph_conv_forward.8} parent=31 // pred_check
          %p997 = pneg %p186
        $region62: #{graph_conv_forward.8} parent=31 // pred_check_branch
          %999 = sbr.rel (%p997) target = $region64
        $region63: #{graph_conv_forward.8} parent=31 // pred_region
          %s1001 = ssub.s32 16, 16
          %1002 = vsyncadd %s965, %s1001
          %s1003 = smul.addr %s33, 16
          %s1004 = scalar_lea.hbm %s5, %s1003
          %s1006 = sshll.u32 %s967, 4
          %s1007 = int_to_ptr.vmem [resolvable:$true] %s1006
          %1009 = dma.vmem_to_hbm [thread:$0]  %s1007, 16, %s1004, %s965
        $region64: #{graph_conv_forward.8} parent=31 // pred_fallthru
          _
      $region32: #{graph_conv_forward.8} parent=5 // pred_fallthru
        _
      %p1010 = scmp.le.s32.totalorder 2, %s24
      // Predicated region
      $region65: #{graph_conv_forward.8} parent=5 // pred_check
        %p1011 = pneg %p1010
      $region66: #{graph_conv_forward.8} parent=5 // pred_check_branch
        %1013 = sbr.rel (%p1011) target = $region68
      $region67: #{graph_conv_forward.8} parent=5 // pred_region
        %s1014 = ssub.s32 %s24, 2
        // Predicated region
        $region69: #{graph_conv_forward.8} parent=67 // pred_check
          %p1015 = pneg %p140
        $region70: #{graph_conv_forward.8} parent=67 // pred_check_branch
          %1017 = sbr.rel (%p1015) target = $region72
        $region71: #{graph_conv_forward.8} parent=67 // pred_region
          %s1018 = sand.u32 %s125, 1
          %s1019 = scalar_lea.sflag [#allocation5], %s1018
          %s1020 = sand.u32 %s125, 1
          %s1021 = smul.addr %s1020, 64
          %s1022 = scalar_lea.vmem [#allocation9], %s1021
          %1023 = dma.done %s1019, 1024
        $region72: #{graph_conv_forward.8} parent=67 // pred_fallthru
          _
        // Predicated region
        $region73: #{graph_conv_forward.8} parent=67 // pred_check
          %p1024 = pneg %p166
        $region74: #{graph_conv_forward.8} parent=67 // pred_check_branch
          %1026 = sbr.rel (%p1024) target = $region76
        $region75: #{graph_conv_forward.8} parent=67 // pred_region
          %s1027 = sand.u32 %s30, 1
          %s1028 = scalar_lea.sflag [#allocation11], %s1027
          %s1029 = sand.u32 %s151, 1
          %s1030 = scalar_lea.vmem [#allocation10], %s1029
          %1031 = dma.done %s1028, 16
        $region76: #{graph_conv_forward.8} parent=67 // pred_fallthru
          _
        // Predicated region
        $region77: #{graph_conv_forward.8} parent=67 // pred_check
          %p1032 = pneg %p192
        $region78: #{graph_conv_forward.8} parent=67 // pred_check_branch
          %1034 = sbr.rel (%p1032) target = $region80
        $region79: #{graph_conv_forward.8} parent=67 // pred_region
          %s1035 = sand.u32 %s30, 1
          %s1036 = scalar_lea.sflag [#allocation11], %s1035
          %s1037 = sand.u32 %s177, 1
          %s1038 = scalar_lea.vmem [#allocation12], %s1037
          %1039 = dma.done %s1036, 16
        $region80: #{graph_conv_forward.8} parent=67 // pred_fallthru
          _
      $region68: #{graph_conv_forward.8} parent=5 // pred_fallthru
        _
    $region6: #{graph_conv_forward.8} parent=1 // loop_footer
      %s28 = sadd.s32 1, %s24
    $region7: #{graph_conv_forward.8} parent=1 // loop_footer_branch
      %23 = sbr.rel target = $region3
    $region8: #{graph_conv_forward.8} parent=1 // loop_exit
      _
    %1040 = vsyncpa [#allocation4], 1
    %s1041 = scalar_lea.sflag [#allocation4], 1
    %1042 = vsyncpa %s1041, 1
    %1043 = vsyncpa [#allocation7], 1
    %s1044 = scalar_lea.sflag [#allocation7], 1
    %1045 = vsyncpa %s1044, 1
    %1046 = vsyncpa [#allocation5], 1
    %s1047 = scalar_lea.sflag [#allocation5], 1
    %1048 = vsyncpa %s1047, 1
    %1049 = vsyncpa [#allocation11], 1
    %s1050 = scalar_lea.sflag [#allocation11], 1
    %1051 = vsyncpa %s1050, 1

</llo_original>
